<compile_context>
chip_gen: v6e
topology: v6e:2x2x1
jax: 0.10.0
libtpu: 0.0.40
codegen_flags: <defaults>
</compile_context>

<pallas_src>
import jax
import jax.numpy as jnp
from jax.experimental import pallas as pl
from jax.experimental.pallas import tpu as pltpu

LANE = 128
BF16 = jnp.bfloat16
F32 = jnp.float32


def _round_up(n, m):
    return ((n + m - 1) // m) * m


def _pad2(x, rows, cols):
    out = jnp.zeros((rows, cols), x.dtype)
    return out.at[:x.shape[0], :x.shape[1]].set(x)


def _vmem_limit_bytes():
    """Chip-aware scoped-VMEM cap: headroom on v7x (64 MiB/TC), more on v5e/v6e."""
    try:
        info = pltpu.get_tpu_info()
        cap = getattr(info, "vmem_capacity_bytes", None)
    except Exception:
        cap = None
    if cap is not None and cap > 64 * 1024 * 1024:      # v5e / v6e: 128 MiB
        return 64 * 1024 * 1024
    return 40 * 1024 * 1024                             # v7x or unknown: stay safe


def _compiler_params(dims):
    return pltpu.CompilerParams(dimension_semantics=dims,
                                vmem_limit_bytes=_vmem_limit_bytes())


def _pick_row_tile(n):
    # Row axis is "parallel": keep >=2 grid steps when possible so both v7x
    # TensorCores get work; otherwise prefer the biggest tile that divides n.
    for t in (1024, 512, 256, 128):
        if n % t == 0 and n // t >= 2:
            return t
    for t in (1024, 512, 256, 128):
        if n % t == 0:
            return t
    return n


def _pick_k_tile(n):
    for t in (1024, 512, 256, 128):
        if n % t == 0:
            return t
    return n


def _full_spec(shape):
    nd = len(shape)
    return pl.BlockSpec(shape, lambda i, _nd=nd: (0,) * _nd)


# ----------------------------------------------------------------------------
# Fused whole-forward kernel (everything VMEM resident, one pallas_call)
# ----------------------------------------------------------------------------
def _make_fused_kernel(num_layers, hp):
    def kernel(*refs):
        a_ll_ref, a_lv_ref, a_vv_ref, pool_ref, xl_ref, xv_ref = refs[:6]
        w_refs = refs[6:6 + 4 * num_layers]
        w1_ref, b1_ref, w2_ref, b2_ref = refs[6 + 4 * num_layers:10 + 4 * num_layers]
        out_ref = refs[10 + 4 * num_layers]

        a_ll = a_ll_ref[...]
        a_lv = a_lv_ref[...]
        a_vv = a_vv_ref[...]
        xl = xl_ref[...]
        xv = xv_ref[...]

        for layer in range(num_layers):        # unrolled: weights are per-layer refs
            w_cat = w_refs[4 * layer][...]     # [fan_in, 2H] = [W_ll | W_lv]
            w_vv = w_refs[4 * layer + 1][...]
            b_ll = w_refs[4 * layer + 2][...]
            b_v = w_refs[4 * layer + 3][...]

            p_cat = jnp.dot(xl, w_cat, preferred_element_type=F32).astype(BF16)
            h_l = jnp.dot(a_ll, p_cat[:, :hp], preferred_element_type=F32) + b_ll
            pv = jnp.dot(xv, w_vv, preferred_element_type=F32)
            h_v = (jnp.dot(a_vv, pv.astype(BF16), preferred_element_type=F32)
                   + jnp.dot(a_lv, p_cat[:, hp:], preferred_element_type=F32)
                   + b_v)
            xl = jnp.maximum(h_l, 0.0).astype(BF16)
            xv = jnp.maximum(h_v, 0.0).astype(BF16)

        pooled = jnp.dot(pool_ref[...], xl, preferred_element_type=F32)
        h = jnp.maximum(jnp.dot(pooled.astype(BF16), w1_ref[...],
                                preferred_element_type=F32) + b1_ref[...], 0.0)
        out_ref[...] = (jnp.dot(h.astype(BF16), w2_ref[...],
                                preferred_element_type=F32) + b2_ref[...])
    return kernel


def hscn_forward_fused(xl, xv, a_ll, a_lv, a_vv, pool_mat, layer_params,
                       head_params, *, hp):
    num_layers = len(layer_params)
    gp = pool_mat.shape[0]
    cp = head_params[2].shape[1]

    inputs = [a_ll, a_lv, a_vv, pool_mat, xl.astype(BF16), xv.astype(BF16)]
    for p in layer_params:
        inputs += [p['w_cat'], p['w_vv'], p['b_ll'], p['b_v']]
    inputs += list(head_params)

    return pl.pallas_call(
        _make_fused_kernel(num_layers, hp),
        grid=(1,),
        in_specs=[_full_spec(x.shape) for x in inputs],
        out_specs=pl.BlockSpec((gp, cp), lambda i: (0, 0)),
        out_shape=jax.ShapeDtypeStruct((gp, cp), F32),
        compiler_params=_compiler_params(("arbitrary",)),
    )(*inputs)


def _fused_vmem_bytes(xl, xv, a_ll, a_lv, a_vv, pool_mat, layer_params,
                      head_params, hp):
    inputs = [a_ll, a_lv, a_vv, pool_mat, xl, xv]
    for p in layer_params:
        inputs += [p['w_cat'], p['w_vv'], p['b_ll'], p['b_v']]
    inputs += list(head_params)
    nbytes = sum(int(x.size) * x.dtype.itemsize for x in inputs)
    nl = a_ll.shape[0]
    interm = 4 * nl * 2 * hp * 4            # p_cat / h_l / spill headroom (f32)
    return 2 * nbytes + interm              # x2: Pallas double-buffers inputs


# ----------------------------------------------------------------------------
# Tiled fallback kernels (large graphs; A_ll streamed from HBM)
# ----------------------------------------------------------------------------
def project_kernel(x_ref, w_ref, p_ref):
    """P = X @ [W_ll | W_lv]  (bf16 MXU inputs, f32 accumulate, bf16 store)."""
    p_ref[...] = jnp.dot(x_ref[...].astype(BF16), w_ref[...],
                         preferred_element_type=F32).astype(BF16)


def local_agg_kernel(a_ref, p_ref, b_ref, out_ref, acc_ref):
    """out_local row tile = relu( sum_k A_ll[i,k] @ P_ll[k] + b_ll )  (bf16 out)."""
    k = pl.program_id(1)

    @pl.when(k == 0)
    def _init():
        acc_ref[...] = jnp.zeros_like(acc_ref)

    acc_ref[...] += jnp.dot(a_ref[...], p_ref[...], preferred_element_type=F32)

    @pl.when(k == pl.num_programs(1) - 1)
    def _finalize():
        out_ref[...] = jnp.maximum(acc_ref[...] + b_ref[...], 0.0).astype(out_ref.dtype)


def virtual_kernel(a_lv_ref, p_ref, a_vv_ref, xv_ref, w_vv_ref, b_ref, out_ref):
    """out_virtual = relu( A_lv @ P_lv + A_vv @ (xv @ W_vv) + b ) — de-tiled (M=nv)."""
    pv = jnp.dot(xv_ref[...].astype(BF16), w_vv_ref[...], preferred_element_type=F32)
    acc = jnp.dot(a_vv_ref[...], pv.astype(BF16), preferred_element_type=F32)
    acc = acc + jnp.dot(a_lv_ref[...], p_ref[...], preferred_element_type=F32)
    out_ref[...] = jnp.maximum(acc + b_ref[...], 0.0).astype(out_ref.dtype)


def head_kernel(pool_ref, x_ref, w1_ref, b1_ref, w2_ref, b2_ref, out_ref, acc_ref):
    """global_mean_pool (pool-matrix matmul, K-tiled only if needed) + lin_1 + ReLU + lin_2."""
    k = pl.program_id(0)

    @pl.when(k == 0)
    def _init():
        acc_ref[...] = jnp.zeros_like(acc_ref)

    acc_ref[...] += jnp.dot(pool_ref[...], x_ref[...].astype(BF16),
                            preferred_element_type=F32)

    @pl.when(k == pl.num_programs(0) - 1)
    def _finalize():
        h = jnp.maximum(jnp.dot(acc_ref[...].astype(BF16), w1_ref[...],
                                preferred_element_type=F32) + b1_ref[...], 0.0)
        out_ref[...] = jnp.dot(h.astype(BF16), w2_ref[...],
                               preferred_element_type=F32) + b2_ref[...]


def project_local(xl, w_cat, *, tm):
    nl, fp = xl.shape
    h2 = w_cat.shape[1]
    assert nl % tm == 0
    return pl.pallas_call(
        project_kernel,
        grid=(nl // tm,),
        in_specs=[pl.BlockSpec((tm, fp), lambda i: (i, 0)),
                  pl.BlockSpec((fp, h2), lambda i: (0, 0))],
        out_specs=pl.BlockSpec((tm, h2), lambda i: (i, 0)),
        out_shape=jax.ShapeDtypeStruct((nl, h2), BF16),
        compiler_params=_compiler_params(("parallel",)),
    )(xl, w_cat)


def aggregate_local(a_ll, p_cat, b_ll, *, tm, tk, hp):
    nl = a_ll.shape[0]
    assert nl % tm == 0 and nl % tk == 0
    return pl.pallas_call(
        local_agg_kernel,
        grid=(nl // tm, nl // tk),
        in_specs=[pl.BlockSpec((tm, tk), lambda i, k: (i, k)),
                  pl.BlockSpec((tk, hp), lambda i, k: (k, 0)),   # P_ll half of P_cat
                  pl.BlockSpec((1, hp), lambda i, k: (0, 0))],
        out_specs=pl.BlockSpec((tm, hp), lambda i, k: (i, 0)),
        out_shape=jax.ShapeDtypeStruct((nl, hp), BF16),
        scratch_shapes=[pltpu.VMEM((tm, hp), F32)],
        compiler_params=_compiler_params(("parallel", "arbitrary")),
    )(a_ll, p_cat, b_ll)


def aggregate_virtual(a_lv, p_cat, a_vv, xv, w_vv, b_v, *, hp):
    nv, nl = a_lv.shape
    fp = xv.shape[1]
    return pl.pallas_call(
        virtual_kernel,
        grid=(1,),
        in_specs=[pl.BlockSpec((nv, nl), lambda i: (0, 0)),
                  pl.BlockSpec((nl, hp), lambda i: (0, 1)),      # P_lv half of P_cat
                  pl.BlockSpec((nv, nv), lambda i: (0, 0)),
                  pl.BlockSpec((nv, fp), lambda i: (0, 0)),
                  pl.BlockSpec((fp, hp), lambda i: (0, 0)),
                  pl.BlockSpec((1, hp), lambda i: (0, 0))],
        out_specs=pl.BlockSpec((nv, hp), lambda i: (0, 0)),
        out_shape=jax.ShapeDtypeStruct((nv, hp), BF16),
        compiler_params=_compiler_params(("arbitrary",)),
    )(a_lv, p_cat, a_vv, xv, w_vv, b_v)


def hscn_head(pool_mat, xl, w1, b1, w2, b2, *, tk, hp):
    gp, nl = pool_mat.shape
    cp = w2.shape[1]
    assert nl % tk == 0
    return pl.pallas_call(
        head_kernel,
        grid=(nl // tk,),
        in_specs=[pl.BlockSpec((gp, tk), lambda k: (0, k)),
                  pl.BlockSpec((tk, hp), lambda k: (k, 0)),
                  pl.BlockSpec((hp, hp), lambda k: (0, 0)),
                  pl.BlockSpec((1, hp), lambda k: (0, 0)),
                  pl.BlockSpec((hp, cp), lambda k: (0, 0)),
                  pl.BlockSpec((1, cp), lambda k: (0, 0))],
        out_specs=pl.BlockSpec((gp, cp), lambda k: (0, 0)),
        out_shape=jax.ShapeDtypeStruct((gp, cp), F32),
        scratch_shapes=[pltpu.VMEM((gp, hp), F32)],
        compiler_params=_compiler_params(("arbitrary",)),
    )(pool_mat, xl, w1, b1, w2, b2)


def hscn_forward_tiled(xl, xv, a_ll, a_lv, a_vv, pool_mat, layer_params,
                       head_params, *, hp, tm=None, tk=None):
    nl = a_ll.shape[0]
    tm = _pick_row_tile(nl) if tm is None else tm
    tk = _pick_k_tile(nl) if tk is None else tk
    assert nl % tm == 0 and nl % tk == 0, "padded local count must divide tiles"
    xl = xl.astype(BF16)
    xv = xv.astype(BF16)
    for p in layer_params:
        p_cat = project_local(xl, p['w_cat'], tm=tm)            # X@[W_ll|W_lv] once
        xl_new = aggregate_local(a_ll, p_cat, p['b_ll'], tm=tm, tk=tk, hp=hp)
        xv = aggregate_virtual(a_lv, p_cat, a_vv, xv, p['w_vv'], p['b_v'], hp=hp)
        xl = xl_new
    w1, b1, w2, b2 = head_params
    tk_head = nl if nl <= 4096 else tk                          # K-tile only when huge
    return hscn_head(pool_mat, xl, w1, b1, w2, b2, tk=tk_head, hp=hp)


def hscn_forward(xl, xv, a_ll, a_lv, a_vv, pool_mat, layer_params, head_params,
                 *, hp, fused=None, tm=None, tk=None):
    if fused is None:
        est = _fused_vmem_bytes(xl, xv, a_ll, a_lv, a_vv, pool_mat,
                                layer_params, head_params, hp)
        fused = est <= _vmem_limit_bytes() // 4
    if fused:
        return hscn_forward_fused(xl, xv, a_ll, a_lv, a_vv, pool_mat,
                                  layer_params, head_params, hp=hp)
    return hscn_forward_tiled(xl, xv, a_ll, a_lv, a_vv, pool_mat,
                              layer_params, head_params, hp=hp, tm=tm, tk=tk)


# ----------------------------------------------------------------------------
# Glue: edge_index -> dense GCN-normalized adjacency, pooling matrix, params
# ----------------------------------------------------------------------------
def dense_adj(edge_index, num_dst, num_src):
    src, dst = edge_index
    return jnp.zeros((num_dst, num_src), F32).at[dst, src].add(1.0)


def gcn_norm_square(a):
    deg = a.sum(axis=1)
    dinv = jnp.where(deg > 0, 1.0 / jnp.sqrt(deg), 0.0)
    return a * dinv[:, None] * dinv[None, :]


def gcn_norm_bipartite(a):
    deg_dst = a.sum(axis=1)
    deg_src = a.sum(axis=0)
    dd = jnp.where(deg_dst > 0, 1.0 / jnp.sqrt(deg_dst), 0.0)
    ds = jnp.where(deg_src > 0, 1.0 / jnp.sqrt(deg_src), 0.0)
    return a * dd[:, None] * ds[None, :]


def linear_params(key, fan_in, fan_out):
    kw, kb = jax.random.split(key)
    w = jax.random.normal(kw, (fan_in, fan_out), F32) / jnp.sqrt(fan_in)
    b = 0.01 * jax.random.normal(kb, (1, fan_out), F32)
    return w, b


# ----------------------------------------------------------------------------
# Pure-JAX references
# ----------------------------------------------------------------------------
def reference_bf16(xl, xv, a_ll, a_lv, a_vv, pool, layer_params, head_params, hp):
    """Mirrors the kernel math (padded bf16 operands / activations, f32 accumulate)."""
    xl = xl.astype(BF16)
    xv = xv.astype(BF16)
    for p in layer_params:
        p_cat = jnp.dot(xl, p['w_cat'], preferred_element_type=F32).astype(BF16)
        h_l = jnp.dot(a_ll, p_cat[:, :hp], preferred_element_type=F32) + p['b_ll']
        pv = jnp.dot(xv, p['w_vv'], preferred_element_type=F32)
        h_v = (jnp.dot(a_vv, pv.astype(BF16), preferred_element_type=F32)
               + jnp.dot(a_lv, p_cat[:, hp:], preferred_element_type=F32)
               + p['b_v'])
        xl = jnp.maximum(h_l, 0.0).astype(BF16)
        xv = jnp.maximum(h_v, 0.0).astype(BF16)
    w1, b1, w2, b2 = head_params
    pooled = jnp.dot(pool, xl, preferred_element_type=F32)
    h = jnp.maximum(jnp.dot(pooled.astype(BF16), w1,
                            preferred_element_type=F32) + b1, 0.0)
    return jnp.dot(h.astype(BF16), w2, preferred_element_type=F32) + b2


def reference_f32(xl, xv, a_ll, a_lv, a_vv, pool, raw_layers, raw_head):
    """Unpadded full-f32 semantics reference (original module math)."""
    for (w_ll, b_ll, w_lv, b_lv, w_vv, b_vv) in raw_layers:
        h_l = a_ll @ (xl @ w_ll) + b_ll
        h_v = a_lv @ (xl @ w_lv) + a_vv @ (xv @ w_vv) + b_lv + b_vv
        xl, xv = jnp.maximum(h_l, 0.0), jnp.maximum(h_v, 0.0)
    w1, b1, w2, b2 = raw_head
    pooled = pool @ xl
    h = jnp.maximum(pooled @ w1 + b1, 0.0)
    return h @ w2 + b2


# ----------------------------------------------------------------------------
if __name__ == "__main__":
    NUM_LOCAL, NUM_VIRTUAL = 200, 6
    NUM_FEATURES, HIDDEN, NUM_CLASSES = 16, 32, 4
    NUM_LAYERS, NUM_GRAPHS = 2, 2

    NL = _round_up(NUM_LOCAL, LANE)      # 256 (padded local nodes)
    NV = _round_up(NUM_VIRTUAL, 8)       # 8
    FP = _round_up(NUM_FEATURES, LANE)   # 128
    HP = _round_up(HIDDEN, LANE)         # 128 (lane-dense hidden)
    CP = _round_up(NUM_CLASSES, LANE)    # 128 (lane-dense classes)
    GP = _round_up(NUM_GRAPHS, 8)        # 8

    root = jax.random.PRNGKey(0)
    keys = jax.random.split(root, 20)

    x_local = jax.random.normal(keys[0], (NUM_LOCAL, NUM_FEATURES), F32)
    x_virtual = jax.random.normal(keys[1], (NUM_VIRTUAL, NUM_FEATURES), F32)

    ll_src = jax.random.randint(keys[2], (800,), 0, NUM_LOCAL)
    ll_dst = jax.random.randint(keys[3], (800,), 0, NUM_LOCAL)
    lv_src = jnp.arange(NUM_LOCAL)
    lv_dst = jax.random.randint(keys[4], (NUM_LOCAL,), 0, NUM_VIRTUAL)
    vv_src = jax.random.randint(keys[5], (24,), 0, NUM_VIRTUAL)
    vv_dst = jax.random.randint(keys[6], (24,), 0, NUM_VIRTUAL)

    a_ll = gcn_norm_square(dense_adj((ll_src, ll_dst), NUM_LOCAL, NUM_LOCAL))
    a_lv = gcn_norm_bipartite(dense_adj((lv_src, lv_dst), NUM_VIRTUAL, NUM_LOCAL))
    a_vv = gcn_norm_square(dense_adj((vv_src, vv_dst), NUM_VIRTUAL, NUM_VIRTUAL))

    batch = (jnp.arange(NUM_LOCAL) * NUM_GRAPHS // NUM_LOCAL).astype(jnp.int32)
    onehot = (batch[None, :] == jnp.arange(NUM_GRAPHS)[:, None]).astype(F32)
    pool = onehot / jnp.maximum(onehot.sum(axis=1, keepdims=True), 1.0)

    # Raw (unpadded, f32) parameters.
    raw_layers, kidx = [], 7
    for layer in range(NUM_LAYERS):
        fan_in = NUM_FEATURES if layer == 0 else HIDDEN
        w_ll, b_ll = linear_params(keys[kidx + 0], fan_in, HIDDEN)
        w_lv, b_lv = linear_params(keys[kidx + 1], fan_in, HIDDEN)
        w_vv, b_vv = linear_params(keys[kidx + 2], fan_in, HIDDEN)
        raw_layers.append((w_ll, b_ll, w_lv, b_lv, w_vv, b_vv))
        kidx += 3
    w1, b1 = linear_params(keys[kidx + 0], HIDDEN, HIDDEN)
    w2, b2 = linear_params(keys[kidx + 1], HIDDEN, NUM_CLASSES)

    # Padded / packed operands: bf16 for MXU inputs, f32 biases.
    xl_p = _pad2(x_local, NL, FP)
    xv_p = _pad2(x_virtual, NV, FP)
    a_ll_p = _pad2(a_ll, NL, NL).astype(BF16)
    a_lv_p = _pad2(a_lv, NV, NL).astype(BF16)
    a_vv_p = _pad2(a_vv, NV, NV).astype(BF16)
    pool_p = _pad2(pool, GP, NL).astype(BF16)

    layer_params = []
    for layer, (lw_ll, lb_ll, lw_lv, lb_lv, lw_vv, lb_vv) in enumerate(raw_layers):
        fin_p = FP if layer == 0 else HP
        w_cat = jnp.concatenate([_pad2(lw_ll, fin_p, HP), _pad2(lw_lv, fin_p, HP)],
                                axis=1).astype(BF16)               # [fan_in, 2H]
        layer_params.append(dict(
            w_cat=w_cat,
            w_vv=_pad2(lw_vv, fin_p, HP).astype(BF16),
            b_ll=_pad2(lb_ll, 1, HP),
            b_v=_pad2(lb_lv + lb_vv, 1, HP)))

    head_params = (_pad2(w1, HP, HP).astype(BF16), _pad2(b1, 1, HP),
                   _pad2(w2, HP, CP).astype(BF16), _pad2(b2, 1, CP))

    # --- Path 1 (default at these sizes): single fused pallas_call. ---
    out_fused = hscn_forward(xl_p, xv_p, a_ll_p, a_lv_p, a_vv_p, pool_p,
                             layer_params, head_params, hp=HP)
    out_fused = jax.block_until_ready(out_fused)[:NUM_GRAPHS, :NUM_CLASSES]

    # --- Path 2: tiled fallback (forced 128 tiles to exercise the (2,2) grid,
    #             bf16 activations, de-tiled virtual aggregation and head). ---
    out_tiled = hscn_forward(xl_p, xv_p, a_ll_p, a_lv_p, a_vv_p, pool_p,
                             layer_params, head_params, hp=HP,
                             fused=False, tm=128, tk=128)
    out_tiled = jax.block_until_ready(out_tiled)[:NUM_GRAPHS, :NUM_CLASSES]

    ref_bf = reference_bf16(xl_p, xv_p, a_ll_p, a_lv_p, a_vv_p, pool_p,
                            layer_params, head_params,
                            HP)[:NUM_GRAPHS, :NUM_CLASSES]
    ref_fp = reference_f32(x_local, x_virtual, a_ll, a_lv, a_vv, pool,
                           raw_layers, (w1, b1, w2, b2))

    assert out_fused.shape == (NUM_GRAPHS, NUM_CLASSES)
    assert jnp.allclose(out_fused, ref_bf, rtol=1e-2, atol=1e-2), \
        "fused kernel mismatch vs bf16-mirroring reference"
    assert jnp.allclose(out_fused, ref_fp, rtol=5e-2, atol=5e-2), \
        "fused kernel mismatch vs f32 unpadded reference"
    assert jnp.allclose(out_tiled, ref_bf, rtol=1e-2, atol=1e-2), \
        "tiled kernel mismatch vs bf16-mirroring reference"
    assert jnp.allclose(out_tiled, ref_fp, rtol=5e-2, atol=5e-2), \
        "tiled kernel mismatch vs f32 unpadded reference"

    print("KERNEL_OK")
</pallas_src>

<mosaic_0001>
module attributes {stable_mosaic.version = 11 : i64} {
  func.func @kernel(%arg0: i32, %arg1: memref<256x256xbf16, #tpu.memory_space<vmem>>, %arg2: memref<8x256xbf16, #tpu.memory_space<vmem>>, %arg3: memref<8x8xbf16, #tpu.memory_space<vmem>>, %arg4: memref<8x256xbf16, #tpu.memory_space<vmem>>, %arg5: memref<256x128xbf16, #tpu.memory_space<vmem>>, %arg6: memref<8x128xbf16, #tpu.memory_space<vmem>>, %arg7: memref<128x256xbf16, #tpu.memory_space<vmem>>, %arg8: memref<128x128xbf16, #tpu.memory_space<vmem>>, %arg9: memref<1x128xf32, #tpu.memory_space<vmem>>, %arg10: memref<1x128xf32, #tpu.memory_space<vmem>>, %arg11: memref<128x256xbf16, #tpu.memory_space<vmem>>, %arg12: memref<128x128xbf16, #tpu.memory_space<vmem>>, %arg13: memref<1x128xf32, #tpu.memory_space<vmem>>, %arg14: memref<1x128xf32, #tpu.memory_space<vmem>>, %arg15: memref<128x128xbf16, #tpu.memory_space<vmem>>, %arg16: memref<1x128xf32, #tpu.memory_space<vmem>>, %arg17: memref<128x128xbf16, #tpu.memory_space<vmem>>, %arg18: memref<1x128xf32, #tpu.memory_space<vmem>>, %arg19: memref<8x128xf32, #tpu.memory_space<vmem>>) attributes {dimension_semantics = [#tpu.dimension_semantics<arbitrary>], iteration_bounds = array<i64: 1>, scalar_prefetch = 0 : i64, scratch_operands = 0 : i64, tpu.core_type = #tpu.core_type<tc>, window_params = [{pipeline_mode = #tpu.pipeline_mode<synchronous>, transform_indices = @transform_0, window_bounds = array<i64: 256, 256>}, {pipeline_mode = #tpu.pipeline_mode<synchronous>, transform_indices = @transform_1, window_bounds = array<i64: 8, 256>}, {pipeline_mode = #tpu.pipeline_mode<synchronous>, transform_indices = @transform_2, window_bounds = array<i64: 8, 8>}, {pipeline_mode = #tpu.pipeline_mode<synchronous>, transform_indices = @transform_3, window_bounds = array<i64: 8, 256>}, {pipeline_mode = #tpu.pipeline_mode<synchronous>, transform_indices = @transform_4, window_bounds = array<i64: 256, 128>}, {pipeline_mode = #tpu.pipeline_mode<synchronous>, transform_indices = @transform_5, window_bounds = array<i64: 8, 128>}, {pipeline_mode = #tpu.pipeline_mode<synchronous>, transform_indices = @transform_6, window_bounds = array<i64: 128, 256>}, {pipeline_mode = #tpu.pipeline_mode<synchronous>, transform_indices = @transform_7, window_bounds = array<i64: 128, 128>}, {pipeline_mode = #tpu.pipeline_mode<synchronous>, transform_indices = @transform_8, window_bounds = array<i64: 1, 128>}, {pipeline_mode = #tpu.pipeline_mode<synchronous>, transform_indices = @transform_9, window_bounds = array<i64: 1, 128>}, {pipeline_mode = #tpu.pipeline_mode<synchronous>, transform_indices = @transform_10, window_bounds = array<i64: 128, 256>}, {pipeline_mode = #tpu.pipeline_mode<synchronous>, transform_indices = @transform_11, window_bounds = array<i64: 128, 128>}, {pipeline_mode = #tpu.pipeline_mode<synchronous>, transform_indices = @transform_12, window_bounds = array<i64: 1, 128>}, {pipeline_mode = #tpu.pipeline_mode<synchronous>, transform_indices = @transform_13, window_bounds = array<i64: 1, 128>}, {pipeline_mode = #tpu.pipeline_mode<synchronous>, transform_indices = @transform_14, window_bounds = array<i64: 128, 128>}, {pipeline_mode = #tpu.pipeline_mode<synchronous>, transform_indices = @transform_15, window_bounds = array<i64: 1, 128>}, {pipeline_mode = #tpu.pipeline_mode<synchronous>, transform_indices = @transform_16, window_bounds = array<i64: 128, 128>}, {pipeline_mode = #tpu.pipeline_mode<synchronous>, transform_indices = @transform_17, window_bounds = array<i64: 1, 128>}, {pipeline_mode = #tpu.pipeline_mode<synchronous>, transform_indices = @transform_18, window_bounds = array<i64: 8, 128>}]} {
    %c0 = arith.constant 0 : index
    %c0_0 = arith.constant 0 : index
    %0 = vector.load %arg1[%c0, %c0_0] : memref<256x256xbf16, #tpu.memory_space<vmem>>, vector<256x256xbf16>
    %c0_1 = arith.constant 0 : index
    %c0_2 = arith.constant 0 : index
    %1 = vector.load %arg5[%c0_1, %c0_2] : memref<256x128xbf16, #tpu.memory_space<vmem>>, vector<256x128xbf16>
    %c0_3 = arith.constant 0 : index
    %c0_4 = arith.constant 0 : index
    %2 = vector.load %arg7[%c0_3, %c0_4] : memref<128x256xbf16, #tpu.memory_space<vmem>>, vector<128x256xbf16>
    %c0_5 = arith.constant 0 : index
    %c0_6 = arith.constant 0 : index
    %3 = vector.load %arg9[%c0_5, %c0_6] : memref<1x128xf32, #tpu.memory_space<vmem>>, vector<1x128xf32>
    %cst = arith.constant dense<0.000000e+00> : vector<256x256xf32>
    %4 = tpu.matmul %1, %2, %cst {dimension_numbers = #tpu.dot_dimension_numbers<[1], [0], [0], [1], [0, 0, 1, 1], [], []>} : vector<256x128xbf16>, vector<128x256xbf16>, vector<256x256xf32> -> vector<256x256xf32>
    %5 = arith.truncf %4 : vector<256x256xf32> to vector<256x256xbf16>
    %6 = vector.extract_strided_slice %5 {offsets = [0, 0], sizes = [256, 128], strides = [1, 1]} : vector<256x256xbf16> to vector<256x128xbf16>
    %cst_7 = arith.constant dense<0.000000e+00> : vector<256x128xf32>
    %7 = tpu.matmul %0, %6, %cst_7 {dimension_numbers = #tpu.dot_dimension_numbers<[1], [0], [0], [1], [0, 0, 1, 1], [], []>} : vector<256x256xbf16>, vector<256x128xbf16>, vector<256x128xf32> -> vector<256x128xf32>
    %8 = vector.broadcast %3 : vector<1x128xf32> to vector<256x128xf32>
    %9 = arith.addf %7, %8 : vector<256x128xf32>
    %cst_8 = arith.constant 0.000000e+00 : f32
    %10 = vector.broadcast %cst_8 : f32 to vector<256x128xf32>
    %11 = arith.maximumf %9, %10 : vector<256x128xf32>
    %12 = arith.truncf %11 : vector<256x128xf32> to vector<256x128xbf16>
    %c0_9 = arith.constant 0 : index
    %c0_10 = arith.constant 0 : index
    %13 = vector.load %arg11[%c0_9, %c0_10] : memref<128x256xbf16, #tpu.memory_space<vmem>>, vector<128x256xbf16>
    %c0_11 = arith.constant 0 : index
    %c0_12 = arith.constant 0 : index
    %14 = vector.load %arg13[%c0_11, %c0_12] : memref<1x128xf32, #tpu.memory_space<vmem>>, vector<1x128xf32>
    %cst_13 = arith.constant dense<0.000000e+00> : vector<256x256xf32>
    %15 = tpu.matmul %12, %13, %cst_13 {dimension_numbers = #tpu.dot_dimension_numbers<[1], [0], [0], [1], [0, 0, 1, 1], [], []>} : vector<256x128xbf16>, vector<128x256xbf16>, vector<256x256xf32> -> vector<256x256xf32>
    %16 = arith.truncf %15 : vector<256x256xf32> to vector<256x256xbf16>
    %17 = vector.extract_strided_slice %16 {offsets = [0, 0], sizes = [256, 128], strides = [1, 1]} : vector<256x256xbf16> to vector<256x128xbf16>
    %cst_14 = arith.constant dense<0.000000e+00> : vector<256x128xf32>
    %18 = tpu.matmul %0, %17, %cst_14 {dimension_numbers = #tpu.dot_dimension_numbers<[1], [0], [0], [1], [0, 0, 1, 1], [], []>} : vector<256x256xbf16>, vector<256x128xbf16>, vector<256x128xf32> -> vector<256x128xf32>
    %19 = vector.broadcast %14 : vector<1x128xf32> to vector<256x128xf32>
    %20 = arith.addf %18, %19 : vector<256x128xf32>
    %cst_15 = arith.constant 0.000000e+00 : f32
    %21 = vector.broadcast %cst_15 : f32 to vector<256x128xf32>
    %22 = arith.maximumf %20, %21 : vector<256x128xf32>
    %23 = arith.truncf %22 : vector<256x128xf32> to vector<256x128xbf16>
    %c0_16 = arith.constant 0 : index
    %c0_17 = arith.constant 0 : index
    %24 = vector.load %arg4[%c0_16, %c0_17] : memref<8x256xbf16, #tpu.memory_space<vmem>>, vector<8x256xbf16>
    %cst_18 = arith.constant dense<0.000000e+00> : vector<8x128xf32>
    %25 = tpu.matmul %24, %23, %cst_18 {dimension_numbers = #tpu.dot_dimension_numbers<[1], [0], [0], [1], [0, 0, 1, 1], [], []>} : vector<8x256xbf16>, vector<256x128xbf16>, vector<8x128xf32> -> vector<8x128xf32>
    %26 = arith.truncf %25 : vector<8x128xf32> to vector<8x128xbf16>
    %c0_19 = arith.constant 0 : index
    %c0_20 = arith.constant 0 : index
    %27 = vector.load %arg15[%c0_19, %c0_20] : memref<128x128xbf16, #tpu.memory_space<vmem>>, vector<128x128xbf16>
    %cst_21 = arith.constant dense<0.000000e+00> : vector<8x128xf32>
    %28 = tpu.matmul %26, %27, %cst_21 {dimension_numbers = #tpu.dot_dimension_numbers<[1], [0], [0], [1], [0, 0, 1, 1], [], []>} : vector<8x128xbf16>, vector<128x128xbf16>, vector<8x128xf32> -> vector<8x128xf32>
    %c0_22 = arith.constant 0 : index
    %c0_23 = arith.constant 0 : index
    %29 = vector.load %arg16[%c0_22, %c0_23] : memref<1x128xf32, #tpu.memory_space<vmem>>, vector<1x128xf32>
    %30 = vector.broadcast %29 : vector<1x128xf32> to vector<8x128xf32>
    %31 = arith.addf %28, %30 : vector<8x128xf32>
    %cst_24 = arith.constant 0.000000e+00 : f32
    %32 = vector.broadcast %cst_24 : f32 to vector<8x128xf32>
    %33 = arith.maximumf %31, %32 : vector<8x128xf32>
    %34 = arith.truncf %33 : vector<8x128xf32> to vector<8x128xbf16>
    %c0_25 = arith.constant 0 : index
    %c0_26 = arith.constant 0 : index
    %35 = vector.load %arg17[%c0_25, %c0_26] : memref<128x128xbf16, #tpu.memory_space<vmem>>, vector<128x128xbf16>
    %cst_27 = arith.constant dense<0.000000e+00> : vector<8x128xf32>
    %36 = tpu.matmul %34, %35, %cst_27 {dimension_numbers = #tpu.dot_dimension_numbers<[1], [0], [0], [1], [0, 0, 1, 1], [], []>} : vector<8x128xbf16>, vector<128x128xbf16>, vector<8x128xf32> -> vector<8x128xf32>
    %c0_28 = arith.constant 0 : index
    %c0_29 = arith.constant 0 : index
    %37 = vector.load %arg18[%c0_28, %c0_29] : memref<1x128xf32, #tpu.memory_space<vmem>>, vector<1x128xf32>
    %38 = vector.broadcast %37 : vector<1x128xf32> to vector<8x128xf32>
    %39 = arith.addf %36, %38 : vector<8x128xf32>
    %c0_30 = arith.constant 0 : index
    %c0_31 = arith.constant 0 : index
    %40 = vector.load %arg19[%c0_30, %c0_31] : memref<8x128xf32, #tpu.memory_space<vmem>>, vector<8x128xf32>
    tpu.vector_store %arg19[%c0_30, %c0_31], %39 {strides = array<i32>} : memref<8x128xf32, #tpu.memory_space<vmem>>, vector<8x128xf32>,
    return
  }
  func.func @transform_0(%arg0: i32) -> (i32, i32) {
    %c0_i32 = arith.constant 0 : i32
    %c0_i32_0 = arith.constant 0 : i32
    %c0_i32_1 = arith.constant 0 : i32
    return %c0_i32, %c0_i32_0 : i32, i32
  }
  func.func @transform_1(%arg0: i32) -> (i32, i32) {
    %c0_i32 = arith.constant 0 : i32
    %c0_i32_0 = arith.constant 0 : i32
    %c0_i32_1 = arith.constant 0 : i32
    return %c0_i32, %c0_i32_0 : i32, i32
  }
  func.func @transform_2(%arg0: i32) -> (i32, i32) {
    %c0_i32 = arith.constant 0 : i32
    %c0_i32_0 = arith.constant 0 : i32
    %c0_i32_1 = arith.constant 0 : i32
    return %c0_i32, %c0_i32_0 : i32, i32
  }
  func.func @transform_3(%arg0: i32) -> (i32, i32) {
    %c0_i32 = arith.constant 0 : i32
    %c0_i32_0 = arith.constant 0 : i32
    %c0_i32_1 = arith.constant 0 : i32
    return %c0_i32, %c0_i32_0 : i32, i32
  }
  func.func @transform_4(%arg0: i32) -> (i32, i32) {
    %c0_i32 = arith.constant 0 : i32
    %c0_i32_0 = arith.constant 0 : i32
    %c0_i32_1 = arith.constant 0 : i32
    return %c0_i32, %c0_i32_0 : i32, i32
  }
  func.func @transform_5(%arg0: i32) -> (i32, i32) {
    %c0_i32 = arith.constant 0 : i32
    %c0_i32_0 = arith.constant 0 : i32
    %c0_i32_1 = arith.constant 0 : i32
    return %c0_i32, %c0_i32_0 : i32, i32
  }
  func.func @transform_6(%arg0: i32) -> (i32, i32) {
    %c0_i32 = arith.constant 0 : i32
    %c0_i32_0 = arith.constant 0 : i32
    %c0_i32_1 = arith.constant 0 : i32
    return %c0_i32, %c0_i32_0 : i32, i32
  }
  func.func @transform_7(%arg0: i32) -> (i32, i32) {
    %c0_i32 = arith.constant 0 : i32
    %c0_i32_0 = arith.constant 0 : i32
    %c0_i32_1 = arith.constant 0 : i32
    return %c0_i32, %c0_i32_0 : i32, i32
  }
  func.func @transform_8(%arg0: i32) -> (i32, i32) {
    %c0_i32 = arith.constant 0 : i32
    %c0_i32_0 = arith.constant 0 : i32
    %c0_i32_1 = arith.constant 0 : i32
    return %c0_i32, %c0_i32_0 : i32, i32
  }
  func.func @transform_9(%arg0: i32) -> (i32, i32) {
    %c0_i32 = arith.constant 0 : i32
    %c0_i32_0 = arith.constant 0 : i32
    %c0_i32_1 = arith.constant 0 : i32
    return %c0_i32, %c0_i32_0 : i32, i32
  }
  func.func @transform_10(%arg0: i32) -> (i32, i32) {
    %c0_i32 = arith.constant 0 : i32
    %c0_i32_0 = arith.constant 0 : i32
    %c0_i32_1 = arith.constant 0 : i32
    return %c0_i32, %c0_i32_0 : i32, i32
  }
  func.func @transform_11(%arg0: i32) -> (i32, i32) {
    %c0_i32 = arith.constant 0 : i32
    %c0_i32_0 = arith.constant 0 : i32
    %c0_i32_1 = arith.constant 0 : i32
    return %c0_i32, %c0_i32_0 : i32, i32
  }
  func.func @transform_12(%arg0: i32) -> (i32, i32) {
    %c0_i32 = arith.constant 0 : i32
    %c0_i32_0 = arith.constant 0 : i32
    %c0_i32_1 = arith.constant 0 : i32
    return %c0_i32, %c0_i32_0 : i32, i32
  }
  func.func @transform_13(%arg0: i32) -> (i32, i32) {
    %c0_i32 = arith.constant 0 : i32
    %c0_i32_0 = arith.constant 0 : i32
    %c0_i32_1 = arith.constant 0 : i32
    return %c0_i32, %c0_i32_0 : i32, i32
  }
  func.func @transform_14(%arg0: i32) -> (i32, i32) {
    %c0_i32 = arith.constant 0 : i32
    %c0_i32_0 = arith.constant 0 : i32
    %c0_i32_1 = arith.constant 0 : i32
    return %c0_i32, %c0_i32_0 : i32, i32
  }
  func.func @transform_15(%arg0: i32) -> (i32, i32) {
    %c0_i32 = arith.constant 0 : i32
    %c0_i32_0 = arith.constant 0 : i32
    %c0_i32_1 = arith.constant 0 : i32
    return %c0_i32, %c0_i32_0 : i32, i32
  }
  func.func @transform_16(%arg0: i32) -> (i32, i32) {
    %c0_i32 = arith.constant 0 : i32
    %c0_i32_0 = arith.constant 0 : i32
    %c0_i32_1 = arith.constant 0 : i32
    return %c0_i32, %c0_i32_0 : i32, i32
  }
  func.func @transform_17(%arg0: i32) -> (i32, i32) {
    %c0_i32 = arith.constant 0 : i32
    %c0_i32_0 = arith.constant 0 : i32
    %c0_i32_1 = arith.constant 0 : i32
    return %c0_i32, %c0_i32_0 : i32, i32
  }
  func.func @transform_18(%arg0: i32) -> (i32, i32) {
    %c0_i32 = arith.constant 0 : i32
    %c0_i32_0 = arith.constant 0 : i32
    %c0_i32_1 = arith.constant 0 : i32
    return %c0_i32, %c0_i32_0 : i32, i32
  }
}

</mosaic_0001>

<llo_original>
// kernel: tpu_custom_call.1
$region0: #{tpu_custom_call.1}
  #allocation0 [shape = 'u32[]', space=smem, size = 0x4, offset = 0x4, fixed_abs, tag = 'smem constant byte address 0x4 - core index']
  #allocation1 [shape = 'u32[144,128]{1,0:T(1,128)}', space=vmem, size = 0x12000, scoped, tag = 'internal scratch']
  %s0 = inlined_call_operand.hbm [shape: bf16[256,256], index: 0, kind: input, shape index: {}]
  %s1 = inlined_call_operand.hbm [shape: bf16[8,256], index: 1, kind: input, shape index: {}]
  %s2 = inlined_call_operand.hbm [shape: bf16[8,8], index: 2, kind: input, shape index: {}]
  %s3 = inlined_call_operand.hbm [shape: bf16[8,256], index: 3, kind: input, shape index: {}]
  %s4 = inlined_call_operand.hbm [shape: bf16[256,128], index: 4, kind: input, shape index: {}]
  %s5 = inlined_call_operand.vmem [shape: bf16[8,128], index: 5, kind: input, shape index: {}]
  %s6 = inlined_call_operand.hbm [shape: bf16[128,256], index: 6, kind: input, shape index: {}]
  %s7 = inlined_call_operand.hbm [shape: bf16[128,128], index: 7, kind: input, shape index: {}]
  %s8 = inlined_call_operand.vmem [shape: f32[1,128], index: 8, kind: input, shape index: {}]
  %s9 = inlined_call_operand.vmem [shape: f32[1,128], index: 9, kind: input, shape index: {}]
  %s10 = inlined_call_operand.hbm [shape: bf16[128,256], index: 10, kind: input, shape index: {}]
  %s11 = inlined_call_operand.hbm [shape: bf16[128,128], index: 11, kind: input, shape index: {}]
  %s12 = inlined_call_operand.vmem [shape: f32[1,128], index: 12, kind: input, shape index: {}]
  %s13 = inlined_call_operand.vmem [shape: f32[1,128], index: 13, kind: input, shape index: {}]
  %s14 = inlined_call_operand.hbm [shape: bf16[128,128], index: 14, kind: input, shape index: {}]
  %s15 = inlined_call_operand.vmem [shape: f32[1,128], index: 15, kind: input, shape index: {}]
  %s16 = inlined_call_operand.hbm [shape: bf16[128,128], index: 16, kind: input, shape index: {}]
  %s17 = inlined_call_operand.vmem [shape: f32[1,128], index: 17, kind: input, shape index: {}]
  %s18 = inlined_call_operand.hbm [shape: f32[8,128], index: 18, kind: output, shape index: {}]
  %s19 = sld [smem:[#allocation0]]
  $region126: #{tpu_custom_call.1} parent=0
    _
  %s21 = ssub.s32 1, %s19
  %s22 = scalar_select 0, %s21, %s19
  $region1: #{tpu_custom_call.1} parent=0
    #allocation2 [shape = 'u8[131072]{0}', space=vmem, size = 0x20000, scoped, tag = 'input window, operand 0, single buffered']
    #allocation3 [shape = 's32[1]{0}', space=sflag, size = 0x4, scoped, tag = 'scoped memory for tpu_custom_call.1']
    #allocation4 [shape = 's32[1]{0}', space=sflag, size = 0x4, scoped, tag = 'scoped memory for tpu_custom_call.1']
    #allocation5 [shape = 'u8[4096]{0}', space=vmem, size = 0x1000, scoped, tag = 'input window, operand 1, single buffered']
    #allocation6 [shape = 's32[1]{0}', space=sflag, size = 0x4, scoped, tag = 'scoped memory for tpu_custom_call.1']
    #allocation7 [shape = 'u8[2048]{0}', space=vmem, size = 0x800, scoped, tag = 'input window, operand 2, single buffered']
    #allocation8 [shape = 'u8[4096]{0}', space=vmem, size = 0x1000, scoped, tag = 'input window, operand 3, single buffered']
    #allocation9 [shape = 's32[1]{0}', space=sflag, size = 0x4, scoped, tag = 'scoped memory for tpu_custom_call.1']
    #allocation10 [shape = 'u8[65536]{0}', space=vmem, size = 0x10000, scoped, tag = 'input window, operand 4, single buffered']
    #allocation11 [shape = 'u8[65536]{0}', space=vmem, size = 0x10000, scoped, tag = 'input window, operand 6, single buffered']
    #allocation12 [shape = 's32[1]{0}', space=sflag, size = 0x4, scoped, tag = 'scoped memory for tpu_custom_call.1']
    #allocation13 [shape = 'u8[32768]{0}', space=vmem, size = 0x8000, scoped, tag = 'input window, operand 7, single buffered']
    #allocation14 [shape = 'u8[65536]{0}', space=vmem, size = 0x10000, scoped, tag = 'input window, operand 10, single buffered']
    #allocation15 [shape = 's32[1]{0}', space=sflag, size = 0x4, scoped, tag = 'scoped memory for tpu_custom_call.1']
    #allocation16 [shape = 'u8[32768]{0}', space=vmem, size = 0x8000, scoped, tag = 'input window, operand 11, single buffered']
    #allocation17 [shape = 'u8[32768]{0}', space=vmem, size = 0x8000, scoped, tag = 'input window, operand 14, single buffered']
    #allocation18 [shape = 's32[1]{0}', space=sflag, size = 0x4, scoped, tag = 'scoped memory for tpu_custom_call.1']
    #allocation19 [shape = 'u8[32768]{0}', space=vmem, size = 0x8000, scoped, tag = 'input window, operand 16, single buffered']
    #allocation20 [shape = 'u8[4096]{0}', space=vmem, size = 0x1000, scoped, tag = 'output window, operand 0, single buffered']
    %23 = vsyncpa [#allocation3], 0
    %24 = vsyncpa [#allocation6], 0
    %25 = vsyncpa [#allocation9], 0
    %26 = vsyncpa [#allocation12], 0
    %27 = vsyncpa [#allocation15], 0
    %28 = vsyncpa [#allocation18], 0
    %29 = vsyncpa [#allocation4], 0
    // Predicated region
    $region2: #{tpu_custom_call.1} parent=1 // pred_check
      _
    $region3: #{tpu_custom_call.1} parent=1 // pred_check_branch
      %31 = sbr.rel (0) target = $region5
    $region4: #{tpu_custom_call.1} parent=1 // pred_region
      %s33 = ssub.s32 4096, 4096
      %34 = vsyncadd [#allocation3], %s33
      %s35 = sshll.u32 [#allocation2], 4
      %s36 = int_to_ptr.vmem [resolvable:$true] %s35
      %41 = dma.hbm_to_vmem [thread:$0]  %s0, 4096, %s36, [#allocation3], 128, 128, 8
    $region5: #{tpu_custom_call.1} parent=1 // pred_fallthru
      _
    // Predicated region
    $region6: #{tpu_custom_call.1} parent=1 // pred_check
      _
    $region7: #{tpu_custom_call.1} parent=1 // pred_check_branch
      %43 = sbr.rel (0) target = $region9
    $region8: #{tpu_custom_call.1} parent=1 // pred_region
      %s45 = ssub.s32 128, 128
      %46 = vsyncadd [#allocation6], %s45
      %s48 = sshll.u32 [#allocation5], 4
      %s49 = int_to_ptr.vmem [resolvable:$true] %s48
      %51 = dma.hbm_to_vmem [thread:$0]  %s1, 128, %s49, [#allocation6]
    $region9: #{tpu_custom_call.1} parent=1 // pred_fallthru
      _
    // Predicated region
    $region10: #{tpu_custom_call.1} parent=1 // pred_check
      _
    $region11: #{tpu_custom_call.1} parent=1 // pred_check_branch
      %53 = sbr.rel (0) target = $region13
    $region12: #{tpu_custom_call.1} parent=1 // pred_region
      %s55 = ssub.s32 64, 64
      %56 = vsyncadd [#allocation6], %s55
      %s58 = sshll.u32 [#allocation7], 4
      %s59 = int_to_ptr.vmem [resolvable:$true] %s58
      %61 = dma.hbm_to_vmem [thread:$0]  %s2, 64, %s59, [#allocation6]
    $region13: #{tpu_custom_call.1} parent=1 // pred_fallthru
      _
    // Predicated region
    $region14: #{tpu_custom_call.1} parent=1 // pred_check
      _
    $region15: #{tpu_custom_call.1} parent=1 // pred_check_branch
      %63 = sbr.rel (0) target = $region17
    $region16: #{tpu_custom_call.1} parent=1 // pred_region
      %s65 = ssub.s32 128, 128
      %66 = vsyncadd [#allocation9], %s65
      %s68 = sshll.u32 [#allocation8], 4
      %s69 = int_to_ptr.vmem [resolvable:$true] %s68
      %71 = dma.hbm_to_vmem [thread:$0]  %s3, 128, %s69, [#allocation9]
    $region17: #{tpu_custom_call.1} parent=1 // pred_fallthru
      _
    // Predicated region
    $region18: #{tpu_custom_call.1} parent=1 // pred_check
      _
    $region19: #{tpu_custom_call.1} parent=1 // pred_check_branch
      %73 = sbr.rel (0) target = $region21
    $region20: #{tpu_custom_call.1} parent=1 // pred_region
      %s75 = ssub.s32 2048, 2048
      %76 = vsyncadd [#allocation9], %s75
      %s77 = sshll.u32 [#allocation10], 4
      %s78 = int_to_ptr.vmem [resolvable:$true] %s77
      %83 = dma.hbm_to_vmem [thread:$0]  %s4, 2048, %s78, [#allocation9], 64, 64, 4
    $region21: #{tpu_custom_call.1} parent=1 // pred_fallthru
      _
    // Predicated region
    $region22: #{tpu_custom_call.1} parent=1 // pred_check
      _
    $region23: #{tpu_custom_call.1} parent=1 // pred_check_branch
      %85 = sbr.rel (0) target = $region25
    $region24: #{tpu_custom_call.1} parent=1 // pred_region
      _
    $region25: #{tpu_custom_call.1} parent=1 // pred_fallthru
      _
    // Predicated region
    $region26: #{tpu_custom_call.1} parent=1 // pred_check
      _
    $region27: #{tpu_custom_call.1} parent=1 // pred_check_branch
      %87 = sbr.rel (0) target = $region29
    $region28: #{tpu_custom_call.1} parent=1 // pred_region
      %s89 = ssub.s32 2048, 2048
      %90 = vsyncadd [#allocation12], %s89
      %s91 = sshll.u32 [#allocation11], 4
      %s92 = int_to_ptr.vmem [resolvable:$true] %s91
      %97 = dma.hbm_to_vmem [thread:$0]  %s6, 2048, %s92, [#allocation12], 128, 128, 8
    $region29: #{tpu_custom_call.1} parent=1 // pred_fallthru
      _
    // Predicated region
    $region30: #{tpu_custom_call.1} parent=1 // pred_check
      _
    $region31: #{tpu_custom_call.1} parent=1 // pred_check_branch
      %99 = sbr.rel (0) target = $region33
    $region32: #{tpu_custom_call.1} parent=1 // pred_region
      %s101 = ssub.s32 1024, 1024
      %102 = vsyncadd [#allocation12], %s101
      %s103 = sshll.u32 [#allocation13], 4
      %s104 = int_to_ptr.vmem [resolvable:$true] %s103
      %109 = dma.hbm_to_vmem [thread:$0]  %s7, 1024, %s104, [#allocation12], 64, 64, 4
    $region33: #{tpu_custom_call.1} parent=1 // pred_fallthru
      _
    // Predicated region
    $region34: #{tpu_custom_call.1} parent=1 // pred_check
      _
    $region35: #{tpu_custom_call.1} parent=1 // pred_check_branch
      %111 = sbr.rel (0) target = $region37
    $region36: #{tpu_custom_call.1} parent=1 // pred_region
      _
    $region37: #{tpu_custom_call.1} parent=1 // pred_fallthru
      _
    // Predicated region
    $region38: #{tpu_custom_call.1} parent=1 // pred_check
      _
    $region39: #{tpu_custom_call.1} parent=1 // pred_check_branch
      %113 = sbr.rel (0) target = $region41
    $region40: #{tpu_custom_call.1} parent=1 // pred_region
      _
    $region41: #{tpu_custom_call.1} parent=1 // pred_fallthru
      _
    // Predicated region
    $region42: #{tpu_custom_call.1} parent=1 // pred_check
      _
    $region43: #{tpu_custom_call.1} parent=1 // pred_check_branch
      %115 = sbr.rel (0) target = $region45
    $region44: #{tpu_custom_call.1} parent=1 // pred_region
      %s117 = ssub.s32 2048, 2048
      %118 = vsyncadd [#allocation15], %s117
      %s119 = sshll.u32 [#allocation14], 4
      %s120 = int_to_ptr.vmem [resolvable:$true] %s119
      %125 = dma.hbm_to_vmem [thread:$0]  %s10, 2048, %s120, [#allocation15], 128, 128, 8
    $region45: #{tpu_custom_call.1} parent=1 // pred_fallthru
      _
    // Predicated region
    $region46: #{tpu_custom_call.1} parent=1 // pred_check
      _
    $region47: #{tpu_custom_call.1} parent=1 // pred_check_branch
      %127 = sbr.rel (0) target = $region49
    $region48: #{tpu_custom_call.1} parent=1 // pred_region
      %s129 = ssub.s32 1024, 1024
      %130 = vsyncadd [#allocation15], %s129
      %s131 = sshll.u32 [#allocation16], 4
      %s132 = int_to_ptr.vmem [resolvable:$true] %s131
      %137 = dma.hbm_to_vmem [thread:$0]  %s11, 1024, %s132, [#allocation15], 64, 64, 4
    $region49: #{tpu_custom_call.1} parent=1 // pred_fallthru
      _
    // Predicated region
    $region50: #{tpu_custom_call.1} parent=1 // pred_check
      _
    $region51: #{tpu_custom_call.1} parent=1 // pred_check_branch
      %139 = sbr.rel (0) target = $region53
    $region52: #{tpu_custom_call.1} parent=1 // pred_region
      _
    $region53: #{tpu_custom_call.1} parent=1 // pred_fallthru
      _
    // Predicated region
    $region54: #{tpu_custom_call.1} parent=1 // pred_check
      _
    $region55: #{tpu_custom_call.1} parent=1 // pred_check_branch
      %141 = sbr.rel (0) target = $region57
    $region56: #{tpu_custom_call.1} parent=1 // pred_region
      _
    $region57: #{tpu_custom_call.1} parent=1 // pred_fallthru
      _
    // Predicated region
    $region58: #{tpu_custom_call.1} parent=1 // pred_check
      _
    $region59: #{tpu_custom_call.1} parent=1 // pred_check_branch
      %143 = sbr.rel (0) target = $region61
    $region60: #{tpu_custom_call.1} parent=1 // pred_region
      %s145 = ssub.s32 1024, 1024
      %146 = vsyncadd [#allocation18], %s145
      %s147 = sshll.u32 [#allocation17], 4
      %s148 = int_to_ptr.vmem [resolvable:$true] %s147
      %153 = dma.hbm_to_vmem [thread:$0]  %s14, 1024, %s148, [#allocation18], 64, 64, 4
    $region61: #{tpu_custom_call.1} parent=1 // pred_fallthru
      _
    // Predicated region
    $region62: #{tpu_custom_call.1} parent=1 // pred_check
      _
    $region63: #{tpu_custom_call.1} parent=1 // pred_check_branch
      %155 = sbr.rel (0) target = $region65
    $region64: #{tpu_custom_call.1} parent=1 // pred_region
      _
    $region65: #{tpu_custom_call.1} parent=1 // pred_fallthru
      _
    // Predicated region
    $region66: #{tpu_custom_call.1} parent=1 // pred_check
      _
    $region67: #{tpu_custom_call.1} parent=1 // pred_check_branch
      %157 = sbr.rel (0) target = $region69
    $region68: #{tpu_custom_call.1} parent=1 // pred_region
      %s159 = ssub.s32 1024, 1024
      %160 = vsyncadd [#allocation18], %s159
      %s161 = sshll.u32 [#allocation19], 4
      %s162 = int_to_ptr.vmem [resolvable:$true] %s161
      %167 = dma.hbm_to_vmem [thread:$0]  %s16, 1024, %s162, [#allocation18], 64, 64, 4
    $region69: #{tpu_custom_call.1} parent=1 // pred_fallthru
      _
    // Predicated region
    $region70: #{tpu_custom_call.1} parent=1 // pred_check
      _
    $region71: #{tpu_custom_call.1} parent=1 // pred_check_branch
      %169 = sbr.rel (0) target = $region73
    $region72: #{tpu_custom_call.1} parent=1 // pred_region
      _
    $region73: #{tpu_custom_call.1} parent=1 // pred_fallthru
      _
    // Predicated region
    $region74: #{tpu_custom_call.1} parent=1 // pred_check
      _
    $region75: #{tpu_custom_call.1} parent=1 // pred_check_branch
      %171 = sbr.rel (0) target = $region77
    $region76: #{tpu_custom_call.1} parent=1 // pred_region
      %172 = dma.done [#allocation3], 4096
    $region77: #{tpu_custom_call.1} parent=1 // pred_fallthru
      _
    // Predicated region
    $region78: #{tpu_custom_call.1} parent=1 // pred_check
      _
    $region79: #{tpu_custom_call.1} parent=1 // pred_check_branch
      %174 = sbr.rel (0) target = $region81
    $region80: #{tpu_custom_call.1} parent=1 // pred_region
      %175 = dma.done [#allocation6], 128
    $region81: #{tpu_custom_call.1} parent=1 // pred_fallthru
      _
    // Predicated region
    $region82: #{tpu_custom_call.1} parent=1 // pred_check
      _
    $region83: #{tpu_custom_call.1} parent=1 // pred_check_branch
      %177 = sbr.rel (0) target = $region85
    $region84: #{tpu_custom_call.1} parent=1 // pred_region
      %178 = dma.done [#allocation6], 64
    $region85: #{tpu_custom_call.1} parent=1 // pred_fallthru
      _
    // Predicated region
    $region86: #{tpu_custom_call.1} parent=1 // pred_check
      _
    $region87: #{tpu_custom_call.1} parent=1 // pred_check_branch
      %180 = sbr.rel (0) target = $region89
    $region88: #{tpu_custom_call.1} parent=1 // pred_region
      %181 = dma.done [#allocation9], 128
    $region89: #{tpu_custom_call.1} parent=1 // pred_fallthru
      _
    // Predicated region
    $region90: #{tpu_custom_call.1} parent=1 // pred_check
      _
    $region91: #{tpu_custom_call.1} parent=1 // pred_check_branch
      %183 = sbr.rel (0) target = $region93
    $region92: #{tpu_custom_call.1} parent=1 // pred_region
      %184 = dma.done [#allocation9], 2048
    $region93: #{tpu_custom_call.1} parent=1 // pred_fallthru
      _
    // Predicated region
    $region94: #{tpu_custom_call.1} parent=1 // pred_check
      _
    $region95: #{tpu_custom_call.1} parent=1 // pred_check_branch
      %186 = sbr.rel (0) target = $region97
    $region96: #{tpu_custom_call.1} parent=1 // pred_region
      %187 = dma.done [#allocation12], 2048
    $region97: #{tpu_custom_call.1} parent=1 // pred_fallthru
      _
    // Predicated region
    $region98: #{tpu_custom_call.1} parent=1 // pred_check
      _
    $region99: #{tpu_custom_call.1} parent=1 // pred_check_branch
      %189 = sbr.rel (0) target = $region101
    $region100: #{tpu_custom_call.1} parent=1 // pred_region
      %190 = dma.done [#allocation12], 1024
    $region101: #{tpu_custom_call.1} parent=1 // pred_fallthru
      _
    // Predicated region
    $region102: #{tpu_custom_call.1} parent=1 // pred_check
      _
    $region103: #{tpu_custom_call.1} parent=1 // pred_check_branch
      %192 = sbr.rel (0) target = $region105
    $region104: #{tpu_custom_call.1} parent=1 // pred_region
      %193 = dma.done [#allocation15], 2048
    $region105: #{tpu_custom_call.1} parent=1 // pred_fallthru
      _
    // Predicated region
    $region106: #{tpu_custom_call.1} parent=1 // pred_check
      _
    $region107: #{tpu_custom_call.1} parent=1 // pred_check_branch
      %195 = sbr.rel (0) target = $region109
    $region108: #{tpu_custom_call.1} parent=1 // pred_region
      %196 = dma.done [#allocation15], 1024
    $region109: #{tpu_custom_call.1} parent=1 // pred_fallthru
      _
    // Predicated region
    $region110: #{tpu_custom_call.1} parent=1 // pred_check
      _
    $region111: #{tpu_custom_call.1} parent=1 // pred_check_branch
      %198 = sbr.rel (0) target = $region113
    $region112: #{tpu_custom_call.1} parent=1 // pred_region
      %199 = dma.done [#allocation18], 1024
    $region113: #{tpu_custom_call.1} parent=1 // pred_fallthru
      _
    // Predicated region
    $region114: #{tpu_custom_call.1} parent=1 // pred_check
      _
    $region115: #{tpu_custom_call.1} parent=1 // pred_check_branch
      %201 = sbr.rel (0) target = $region117
    $region116: #{tpu_custom_call.1} parent=1 // pred_region
      %202 = dma.done [#allocation18], 1024
    $region117: #{tpu_custom_call.1} parent=1 // pred_fallthru
      _
    %v204 = vld [vmem:[#allocation2] sm:$0xff]
    %v205 = vld [vmem:[#allocation2 + $0x8] sm:$0xff]
    %v206 = vld [vmem:[#allocation2 + $0x10] sm:$0xff]
    %v207 = vld [vmem:[#allocation2 + $0x18] sm:$0xff]
    %v208 = vld [vmem:[#allocation2 + $0x20] sm:$0xff]
    %v209 = vld [vmem:[#allocation2 + $0x28] sm:$0xff]
    %v210 = vld [vmem:[#allocation2 + $0x30] sm:$0xff]
    %v211 = vld [vmem:[#allocation2 + $0x38] sm:$0xff]
    %v212 = vld [vmem:[#allocation2 + $0x40] sm:$0xff]
    %v213 = vld [vmem:[#allocation2 + $0x48] sm:$0xff]
    %v214 = vld [vmem:[#allocation2 + $0x50] sm:$0xff]
    %v215 = vld [vmem:[#allocation2 + $0x58] sm:$0xff]
    %v216 = vld [vmem:[#allocation2 + $0x60] sm:$0xff]
    %v217 = vld [vmem:[#allocation2 + $0x68] sm:$0xff]
    %v218 = vld [vmem:[#allocation2 + $0x70] sm:$0xff]
    %v219 = vld [vmem:[#allocation2 + $0x78] sm:$0xff]
    %v220 = vld [vmem:[#allocation2 + $0x80] sm:$0xff]
    %v221 = vld [vmem:[#allocation2 + $0x88] sm:$0xff]
    %v222 = vld [vmem:[#allocation2 + $0x90] sm:$0xff]
    %v223 = vld [vmem:[#allocation2 + $0x98] sm:$0xff]
    %v224 = vld [vmem:[#allocation2 + $0xa0] sm:$0xff]
    %v225 = vld [vmem:[#allocation2 + $0xa8] sm:$0xff]
    %v226 = vld [vmem:[#allocation2 + $0xb0] sm:$0xff]
    %v227 = vld [vmem:[#allocation2 + $0xb8] sm:$0xff]
    %v228 = vld [vmem:[#allocation2 + $0xc0] sm:$0xff]
    %v229 = vld [vmem:[#allocation2 + $0xc8] sm:$0xff]
    %v230 = vld [vmem:[#allocation2 + $0xd0] sm:$0xff]
    %v231 = vld [vmem:[#allocation2 + $0xd8] sm:$0xff]
    %v232 = vld [vmem:[#allocation2 + $0xe0] sm:$0xff]
    %v233 = vld [vmem:[#allocation2 + $0xe8] sm:$0xff]
    %v234 = vld [vmem:[#allocation2 + $0xf0] sm:$0xff]
    %v235 = vld [vmem:[#allocation2 + $0xf8] sm:$0xff]
    %v236 = vld [vmem:[#allocation10] sm:$0xf]
    %v237 = vld [vmem:[#allocation10 + $0x4] sm:$0xf]
    %v238 = vld [vmem:[#allocation10 + $0x8] sm:$0xf]
    %v239 = vld [vmem:[#allocation10 + $0xc] sm:$0xf]
    %v240 = vld [vmem:[#allocation10 + $0x10] sm:$0xf]
    %v241 = vld [vmem:[#allocation10 + $0x14] sm:$0xf]
    %v242 = vld [vmem:[#allocation10 + $0x18] sm:$0xf]
    %v243 = vld [vmem:[#allocation10 + $0x1c] sm:$0xf]
    %v244 = vld [vmem:[#allocation10 + $0x20] sm:$0xf]
    %v245 = vld [vmem:[#allocation10 + $0x24] sm:$0xf]
    %v246 = vld [vmem:[#allocation10 + $0x28] sm:$0xf]
    %v247 = vld [vmem:[#allocation10 + $0x2c] sm:$0xf]
    %v248 = vld [vmem:[#allocation10 + $0x30] sm:$0xf]
    %v249 = vld [vmem:[#allocation10 + $0x34] sm:$0xf]
    %v250 = vld [vmem:[#allocation10 + $0x38] sm:$0xf]
    %v251 = vld [vmem:[#allocation10 + $0x3c] sm:$0xf]
    %v252 = vld [vmem:[#allocation10 + $0x40] sm:$0xf]
    %v253 = vld [vmem:[#allocation10 + $0x44] sm:$0xf]
    %v254 = vld [vmem:[#allocation10 + $0x48] sm:$0xf]
    %v255 = vld [vmem:[#allocation10 + $0x4c] sm:$0xf]
    %v256 = vld [vmem:[#allocation10 + $0x50] sm:$0xf]
    %v257 = vld [vmem:[#allocation10 + $0x54] sm:$0xf]
    %v258 = vld [vmem:[#allocation10 + $0x58] sm:$0xf]
    %v259 = vld [vmem:[#allocation10 + $0x5c] sm:$0xf]
    %v260 = vld [vmem:[#allocation10 + $0x60] sm:$0xf]
    %v261 = vld [vmem:[#allocation10 + $0x64] sm:$0xf]
    %v262 = vld [vmem:[#allocation10 + $0x68] sm:$0xf]
    %v263 = vld [vmem:[#allocation10 + $0x6c] sm:$0xf]
    %v264 = vld [vmem:[#allocation10 + $0x70] sm:$0xf]
    %v265 = vld [vmem:[#allocation10 + $0x74] sm:$0xf]
    %v266 = vld [vmem:[#allocation10 + $0x78] sm:$0xf]
    %v267 = vld [vmem:[#allocation10 + $0x7c] sm:$0xf]
    %v268 = vld [vmem:[#allocation11] sm:$0xff]
    %v269 = vld [vmem:[#allocation11 + $0x8] sm:$0xff]
    %v270 = vld [vmem:[#allocation11 + $0x10] sm:$0xff]
    %v271 = vld [vmem:[#allocation11 + $0x18] sm:$0xff]
    %v272 = vld [vmem:[#allocation11 + $0x20] sm:$0xff]
    %v273 = vld [vmem:[#allocation11 + $0x28] sm:$0xff]
    %v274 = vld [vmem:[#allocation11 + $0x30] sm:$0xff]
    %v275 = vld [vmem:[#allocation11 + $0x38] sm:$0xff]
    %v276 = vld [vmem:[#allocation11 + $0x40] sm:$0xff]
    %v277 = vld [vmem:[#allocation11 + $0x48] sm:$0xff]
    %v278 = vld [vmem:[#allocation11 + $0x50] sm:$0xff]
    %v279 = vld [vmem:[#allocation11 + $0x58] sm:$0xff]
    %v280 = vld [vmem:[#allocation11 + $0x60] sm:$0xff]
    %v281 = vld [vmem:[#allocation11 + $0x68] sm:$0xff]
    %v282 = vld [vmem:[#allocation11 + $0x70] sm:$0xff]
    %v283 = vld [vmem:[#allocation11 + $0x78] sm:$0xff]
    %v284 = vld [vmem:[%s8] sm:$0x1]
    %v317 = vunpack.c.l.b16 %v236
    %v318 = vunpack.c.l.b16 %v237
    %v319 = vunpack.c.l.b16 %v238
    %v320 = vunpack.c.l.b16 %v239
    %v321 = vunpack.c.l.b16 %v240
    %v322 = vunpack.c.l.b16 %v241
    %v323 = vunpack.c.l.b16 %v242
    %v324 = vunpack.c.l.b16 %v243
    %v325 = vunpack.c.l.b16 %v244
    %v326 = vunpack.c.l.b16 %v245
    %v327 = vunpack.c.l.b16 %v246
    %v328 = vunpack.c.l.b16 %v247
    %v329 = vunpack.c.l.b16 %v248
    %v330 = vunpack.c.l.b16 %v249
    %v331 = vunpack.c.l.b16 %v250
    %v332 = vunpack.c.l.b16 %v251
    %v333 = vunpack.c.l.b16 %v252
    %v334 = vunpack.c.l.b16 %v253
    %v335 = vunpack.c.l.b16 %v254
    %v336 = vunpack.c.l.b16 %v255
    %v337 = vunpack.c.l.b16 %v256
    %v338 = vunpack.c.l.b16 %v257
    %v339 = vunpack.c.l.b16 %v258
    %v340 = vunpack.c.l.b16 %v259
    %v341 = vunpack.c.l.b16 %v260
    %v342 = vunpack.c.l.b16 %v261
    %v343 = vunpack.c.l.b16 %v262
    %v344 = vunpack.c.l.b16 %v263
    %v345 = vunpack.c.l.b16 %v264
    %v346 = vunpack.c.l.b16 %v265
    %v347 = vunpack.c.l.b16 %v266
    %v348 = vunpack.c.l.b16 %v267
    %v349 = vpack.c.b16 %v318, %v317
    %v350 = vpack.c.b16 %v320, %v319
    %v351 = vpack.c.b16 %v322, %v321
    %v352 = vpack.c.b16 %v324, %v323
    %v353 = vpack.c.b16 %v326, %v325
    %v354 = vpack.c.b16 %v328, %v327
    %v355 = vpack.c.b16 %v330, %v329
    %v356 = vpack.c.b16 %v332, %v331
    %v357 = vpack.c.b16 %v334, %v333
    %v358 = vpack.c.b16 %v336, %v335
    %v359 = vpack.c.b16 %v338, %v337
    %v360 = vpack.c.b16 %v340, %v339
    %v361 = vpack.c.b16 %v342, %v341
    %v362 = vpack.c.b16 %v344, %v343
    %v363 = vpack.c.b16 %v346, %v345
    %v364 = vpack.c.b16 %v348, %v347
    %v397 = vunpack.c.l.b16 %v268
    %v398 = vunpack.c.h.b16 %v268
    %v399 = vunpack.c.l.b16 %v269
    %v400 = vunpack.c.h.b16 %v269
    %v401 = vunpack.c.l.b16 %v270
    %v402 = vunpack.c.h.b16 %v270
    %v403 = vunpack.c.l.b16 %v271
    %v404 = vunpack.c.h.b16 %v271
    %v405 = vunpack.c.l.b16 %v272
    %v406 = vunpack.c.h.b16 %v272
    %v407 = vunpack.c.l.b16 %v273
    %v408 = vunpack.c.h.b16 %v273
    %v409 = vunpack.c.l.b16 %v274
    %v410 = vunpack.c.h.b16 %v274
    %v411 = vunpack.c.l.b16 %v275
    %v412 = vunpack.c.h.b16 %v275
    %v413 = vunpack.c.l.b16 %v276
    %v414 = vunpack.c.h.b16 %v276
    %v415 = vunpack.c.l.b16 %v277
    %v416 = vunpack.c.h.b16 %v277
    %v417 = vunpack.c.l.b16 %v278
    %v418 = vunpack.c.h.b16 %v278
    %v419 = vunpack.c.l.b16 %v279
    %v420 = vunpack.c.h.b16 %v279
    %v421 = vunpack.c.l.b16 %v280
    %v422 = vunpack.c.h.b16 %v280
    %v423 = vunpack.c.l.b16 %v281
    %v424 = vunpack.c.h.b16 %v281
    %v425 = vunpack.c.l.b16 %v282
    %v426 = vunpack.c.h.b16 %v282
    %v427 = vunpack.c.l.b16 %v283
    %v428 = vunpack.c.h.b16 %v283
    %v429 = vpack.c.b16 %v399, %v397
    %v430 = vpack.c.b16 %v400, %v398
    %v431 = vpack.c.b16 %v403, %v401
    %v432 = vpack.c.b16 %v404, %v402
    %v433 = vpack.c.b16 %v407, %v405
    %v434 = vpack.c.b16 %v408, %v406
    %v435 = vpack.c.b16 %v411, %v409
    %v436 = vpack.c.b16 %v412, %v410
    %v437 = vpack.c.b16 %v415, %v413
    %v438 = vpack.c.b16 %v416, %v414
    %v439 = vpack.c.b16 %v419, %v417
    %v440 = vpack.c.b16 %v420, %v418
    %v441 = vpack.c.b16 %v423, %v421
    %v442 = vpack.c.b16 %v424, %v422
    %v443 = vpack.c.b16 %v427, %v425
    %v444 = vpack.c.b16 %v428, %v426
    %461 = vmatprep.subr.bf16.mxu0 %v444
    %462 = vmatpush1.bf16.msra.mxu0 %v443
    %463 = vmatprep.subr.bf16.mxu0 %v442
    %464 = vmatpush1.bf16.msra.mxu0 %v441
    %465 = vmatprep.subr.bf16.mxu0 %v440
    %466 = vmatpush1.bf16.msra.mxu0 %v439
    %467 = vmatprep.subr.bf16.mxu0 %v438
    %468 = vmatpush1.bf16.msra.mxu0 %v437
    %469 = vmatprep.subr.bf16.mxu0 %v436
    %470 = vmatpush1.bf16.msra.mxu0 %v435
    %471 = vmatprep.subr.bf16.mxu0 %v434
    %472 = vmatpush1.bf16.msra.mxu0 %v433
    %473 = vmatprep.subr.bf16.mxu0 %v432
    %474 = vmatpush1.bf16.msra.mxu0 %v431
    %475 = vmatprep.subr.bf16.mxu0 %v430
    %476 = vmatpush1.bf16.msra.mxu0 %v429
    %477 = vmatprep.subr.bf16.mxu0 0
    %478 = vmatpush2.bf16.msra.mxu0 0
    %479 = vmatprep.subr.bf16.mxu0 0
    %480 = vmatpush2.bf16.msra.mxu0 0
    %481 = vmatprep.subr.bf16.mxu0 0
    %482 = vmatpush2.bf16.msra.mxu0 0
    %483 = vmatprep.subr.bf16.mxu0 0
    %484 = vmatpush2.bf16.msra.mxu0 0
    %485 = vmatprep.subr.bf16.mxu0 0
    %486 = vmatpush2.bf16.msra.mxu0 0
    %487 = vmatprep.subr.bf16.mxu0 0
    %488 = vmatpush2.bf16.msra.mxu0 0
    %489 = vmatprep.subr.bf16.mxu0 0
    %490 = vmatpush2.bf16.msra.mxu0 0
    %491 = vmatprep.subr.bf16.mxu0 0
    %492 = vmatpush2.bf16.msra.mxu0 0
    %493 = vmatprep.mubr.bf16.mxu0 0
    %494 = vmatmul.mubr.bf16.gmra.mxu0 %v349
    %v495 = vpop.f32.mrf.mxu0
    %v496 = vadd.f32 0.0, %v495
    %v497 = vpop.f32.mrf.mxu0
    %v498 = vpop.f32.mrf.mxu0
    %v499 = vadd.f32 0.0, %v498
    %v500 = vpop.f32.mrf.mxu0
    %501 = vmatprep.mubr.bf16.mxu0 0
    %502 = vmatmul.mubr.bf16.gmra.mxu0 %v350
    %v503 = vpop.f32.mrf.mxu0
    %v504 = vadd.f32 0.0, %v503
    %v505 = vpop.f32.mrf.mxu0
    %v506 = vpop.f32.mrf.mxu0
    %v507 = vadd.f32 0.0, %v506
    %v508 = vpop.f32.mrf.mxu0
    %509 = vmatprep.mubr.bf16.mxu0 0
    %510 = vmatmul.mubr.bf16.gmra.mxu0 %v351
    %v511 = vpop.f32.mrf.mxu0
    %v512 = vadd.f32 0.0, %v511
    %v513 = vpop.f32.mrf.mxu0
    %v514 = vpop.f32.mrf.mxu0
    %v515 = vadd.f32 0.0, %v514
    %v516 = vpop.f32.mrf.mxu0
    %517 = vmatprep.mubr.bf16.mxu0 0
    %518 = vmatmul.mubr.bf16.gmra.mxu0 %v352
    %v519 = vpop.f32.mrf.mxu0
    %v520 = vadd.f32 0.0, %v519
    %v521 = vpop.f32.mrf.mxu0
    %v522 = vpop.f32.mrf.mxu0
    %v523 = vadd.f32 0.0, %v522
    %v524 = vpop.f32.mrf.mxu0
    %525 = vmatprep.mubr.bf16.mxu0 0
    %526 = vmatmul.mubr.bf16.gmra.mxu0 %v353
    %v527 = vpop.f32.mrf.mxu0
    %v528 = vadd.f32 0.0, %v527
    %v529 = vpop.f32.mrf.mxu0
    %v530 = vpop.f32.mrf.mxu0
    %v531 = vadd.f32 0.0, %v530
    %v532 = vpop.f32.mrf.mxu0
    %533 = vmatprep.mubr.bf16.mxu0 0
    %534 = vmatmul.mubr.bf16.gmra.mxu0 %v354
    %v535 = vpop.f32.mrf.mxu0
    %v536 = vadd.f32 0.0, %v535
    %v537 = vpop.f32.mrf.mxu0
    %v538 = vpop.f32.mrf.mxu0
    %v539 = vadd.f32 0.0, %v538
    %v540 = vpop.f32.mrf.mxu0
    %541 = vmatprep.mubr.bf16.mxu0 0
    %542 = vmatmul.mubr.bf16.gmra.mxu0 %v355
    %v543 = vpop.f32.mrf.mxu0
    %v544 = vadd.f32 0.0, %v543
    %v545 = vpop.f32.mrf.mxu0
    %v546 = vpop.f32.mrf.mxu0
    %v547 = vadd.f32 0.0, %v546
    %v548 = vpop.f32.mrf.mxu0
    %549 = vmatprep.mubr.bf16.mxu0 0
    %550 = vmatmul.mubr.bf16.gmra.mxu0 %v356
    %v551 = vpop.f32.mrf.mxu0
    %v552 = vadd.f32 0.0, %v551
    %v553 = vpop.f32.mrf.mxu0
    %v554 = vpop.f32.mrf.mxu0
    %v555 = vadd.f32 0.0, %v554
    %v556 = vpop.f32.mrf.mxu0
    %557 = vmatprep.mubr.bf16.mxu0 0
    %558 = vmatmul.mubr.bf16.gmra.mxu0 %v357
    %v559 = vpop.f32.mrf.mxu0
    %v560 = vadd.f32 0.0, %v559
    %v561 = vpop.f32.mrf.mxu0
    %v562 = vpop.f32.mrf.mxu0
    %v563 = vadd.f32 0.0, %v562
    %v564 = vpop.f32.mrf.mxu0
    %565 = vmatprep.mubr.bf16.mxu0 0
    %566 = vmatmul.mubr.bf16.gmra.mxu0 %v358
    %v567 = vpop.f32.mrf.mxu0
    %v568 = vadd.f32 0.0, %v567
    %v569 = vpop.f32.mrf.mxu0
    %v570 = vpop.f32.mrf.mxu0
    %v571 = vadd.f32 0.0, %v570
    %v572 = vpop.f32.mrf.mxu0
    %573 = vmatprep.mubr.bf16.mxu0 0
    %574 = vmatmul.mubr.bf16.gmra.mxu0 %v359
    %v575 = vpop.f32.mrf.mxu0
    %v576 = vadd.f32 0.0, %v575
    %v577 = vpop.f32.mrf.mxu0
    %v578 = vpop.f32.mrf.mxu0
    %v579 = vadd.f32 0.0, %v578
    %v580 = vpop.f32.mrf.mxu0
    %581 = vmatprep.mubr.bf16.mxu0 0
    %582 = vmatmul.mubr.bf16.gmra.mxu0 %v360
    %v583 = vpop.f32.mrf.mxu0
    %v584 = vadd.f32 0.0, %v583
    %v585 = vpop.f32.mrf.mxu0
    %v586 = vpop.f32.mrf.mxu0
    %v587 = vadd.f32 0.0, %v586
    %v588 = vpop.f32.mrf.mxu0
    %589 = vmatprep.mubr.bf16.mxu0 0
    %590 = vmatmul.mubr.bf16.gmra.mxu0 %v361
    %v591 = vpop.f32.mrf.mxu0
    %v592 = vadd.f32 0.0, %v591
    %v593 = vpop.f32.mrf.mxu0
    %v594 = vpop.f32.mrf.mxu0
    %v595 = vadd.f32 0.0, %v594
    %v596 = vpop.f32.mrf.mxu0
    %597 = vmatprep.mubr.bf16.mxu0 0
    %598 = vmatmul.mubr.bf16.gmra.mxu0 %v362
    %v599 = vpop.f32.mrf.mxu0
    %v600 = vadd.f32 0.0, %v599
    %v601 = vpop.f32.mrf.mxu0
    %v602 = vpop.f32.mrf.mxu0
    %v603 = vadd.f32 0.0, %v602
    %v604 = vpop.f32.mrf.mxu0
    %605 = vmatprep.mubr.bf16.mxu0 0
    %606 = vmatmul.mubr.bf16.gmra.mxu0 %v363
    %v607 = vpop.f32.mrf.mxu0
    %v608 = vadd.f32 0.0, %v607
    %v609 = vpop.f32.mrf.mxu0
    %v610 = vpop.f32.mrf.mxu0
    %v611 = vadd.f32 0.0, %v610
    %v612 = vpop.f32.mrf.mxu0
    %613 = vmatprep.mubr.bf16.mxu0 0
    %614 = vmatmul.mubr.bf16.gmra.mxu0 %v364
    %v615 = vpop.f32.mrf.mxu0
    %v616 = vadd.f32 0.0, %v615
    %v617 = vpop.f32.mrf.mxu0
    %v618 = vpop.f32.mrf.mxu0
    %v619 = vadd.f32 0.0, %v618
    %v620 = vpop.f32.mrf.mxu0
    %621 = vdwg.mxu0
    %v622 = vpack.c.bf16 %v499, %v496
    %v623 = vpack.c.bf16 %v507, %v504
    %v624 = vpack.c.bf16 %v515, %v512
    %v625 = vpack.c.bf16 %v523, %v520
    %v626 = vpack.c.bf16 %v531, %v528
    %v627 = vpack.c.bf16 %v539, %v536
    %v628 = vpack.c.bf16 %v547, %v544
    %v629 = vpack.c.bf16 %v555, %v552
    %v630 = vpack.c.bf16 %v563, %v560
    %v631 = vpack.c.bf16 %v571, %v568
    %v632 = vpack.c.bf16 %v579, %v576
    %v633 = vpack.c.bf16 %v587, %v584
    %v634 = vpack.c.bf16 %v595, %v592
    %v635 = vpack.c.bf16 %v603, %v600
    %v636 = vpack.c.bf16 %v611, %v608
    %v637 = vpack.c.bf16 %v619, %v616
    %v639 = vlaneseq
    %v640 = vshrl.u32 %v639, 7
    %v641 = vsub.s32 0, %v640
    %v642 = vrot.slane %v284, %v641
    %v676 = vunpack.c.l.b16 %v204
    %v677 = vunpack.c.h.b16 %v204
    %v678 = vunpack.c.l.b16 %v205
    %v679 = vunpack.c.h.b16 %v205
    %v680 = vunpack.c.l.b16 %v206
    %v681 = vunpack.c.h.b16 %v206
    %v682 = vunpack.c.l.b16 %v207
    %v683 = vunpack.c.h.b16 %v207
    %v684 = vunpack.c.l.b16 %v208
    %v685 = vunpack.c.h.b16 %v208
    %v686 = vunpack.c.l.b16 %v209
    %v687 = vunpack.c.h.b16 %v209
    %v688 = vunpack.c.l.b16 %v210
    %v689 = vunpack.c.h.b16 %v210
    %v690 = vunpack.c.l.b16 %v211
    %v691 = vunpack.c.h.b16 %v211
    %v692 = vunpack.c.l.b16 %v212
    %v693 = vunpack.c.h.b16 %v212
    %v694 = vunpack.c.l.b16 %v213
    %v695 = vunpack.c.h.b16 %v213
    %v696 = vunpack.c.l.b16 %v214
    %v697 = vunpack.c.h.b16 %v214
    %v698 = vunpack.c.l.b16 %v215
    %v699 = vunpack.c.h.b16 %v215
    %v700 = vunpack.c.l.b16 %v216
    %v701 = vunpack.c.h.b16 %v216
    %v702 = vunpack.c.l.b16 %v217
    %v703 = vunpack.c.h.b16 %v217
    %v704 = vunpack.c.l.b16 %v218
    %v705 = vunpack.c.h.b16 %v218
    %v706 = vunpack.c.l.b16 %v219
    %v707 = vunpack.c.h.b16 %v219
    %v708 = vunpack.c.l.b16 %v220
    %v709 = vunpack.c.h.b16 %v220
    %v710 = vunpack.c.l.b16 %v221
    %v711 = vunpack.c.h.b16 %v221
    %v712 = vunpack.c.l.b16 %v222
    %v713 = vunpack.c.h.b16 %v222
    %v714 = vunpack.c.l.b16 %v223
    %v715 = vunpack.c.h.b16 %v223
    %v716 = vunpack.c.l.b16 %v224
    %v717 = vunpack.c.h.b16 %v224
    %v718 = vunpack.c.l.b16 %v225
    %v719 = vunpack.c.h.b16 %v225
    %v720 = vunpack.c.l.b16 %v226
    %v721 = vunpack.c.h.b16 %v226
    %v722 = vunpack.c.l.b16 %v227
    %v723 = vunpack.c.h.b16 %v227
    %v724 = vunpack.c.l.b16 %v228
    %v725 = vunpack.c.h.b16 %v228
    %v726 = vunpack.c.l.b16 %v229
    %v727 = vunpack.c.h.b16 %v229
    %v728 = vunpack.c.l.b16 %v230
    %v729 = vunpack.c.h.b16 %v230
    %v730 = vunpack.c.l.b16 %v231
    %v731 = vunpack.c.h.b16 %v231
    %v732 = vunpack.c.l.b16 %v232
    %v733 = vunpack.c.h.b16 %v232
    %v734 = vunpack.c.l.b16 %v233
    %v735 = vunpack.c.h.b16 %v233
    %v736 = vunpack.c.l.b16 %v234
    %v737 = vunpack.c.h.b16 %v234
    %v738 = vunpack.c.l.b16 %v235
    %v739 = vunpack.c.h.b16 %v235
    %v740 = vpack.c.b16 %v678, %v676
    %v741 = vpack.c.b16 %v679, %v677
    %v742 = vpack.c.b16 %v682, %v680
    %v743 = vpack.c.b16 %v683, %v681
    %v744 = vpack.c.b16 %v686, %v684
    %v745 = vpack.c.b16 %v687, %v685
    %v746 = vpack.c.b16 %v690, %v688
    %v747 = vpack.c.b16 %v691, %v689
    %v748 = vpack.c.b16 %v694, %v692
    %v749 = vpack.c.b16 %v695, %v693
    %v750 = vpack.c.b16 %v698, %v696
    %v751 = vpack.c.b16 %v699, %v697
    %v752 = vpack.c.b16 %v702, %v700
    %v753 = vpack.c.b16 %v703, %v701
    %v754 = vpack.c.b16 %v706, %v704
    %v755 = vpack.c.b16 %v707, %v705
    %v756 = vpack.c.b16 %v710, %v708
    %v757 = vpack.c.b16 %v711, %v709
    %v758 = vpack.c.b16 %v714, %v712
    %v759 = vpack.c.b16 %v715, %v713
    %v760 = vpack.c.b16 %v718, %v716
    %v761 = vpack.c.b16 %v719, %v717
    %v762 = vpack.c.b16 %v722, %v720
    %v763 = vpack.c.b16 %v723, %v721
    %v764 = vpack.c.b16 %v726, %v724
    %v765 = vpack.c.b16 %v727, %v725
    %v766 = vpack.c.b16 %v730, %v728
    %v767 = vpack.c.b16 %v731, %v729
    %v768 = vpack.c.b16 %v734, %v732
    %v769 = vpack.c.b16 %v735, %v733
    %v770 = vpack.c.b16 %v738, %v736
    %v771 = vpack.c.b16 %v739, %v737
    %804 = vmatprep.subr.bf16.mxu0 0
    %805 = vmatpush1.bf16.msra.mxu0 %v629
    %806 = vmatprep.subr.bf16.mxu0 0
    %807 = vmatpush1.bf16.msra.mxu0 %v628
    %808 = vmatprep.subr.bf16.mxu0 0
    %809 = vmatpush1.bf16.msra.mxu0 %v627
    %810 = vmatprep.subr.bf16.mxu0 0
    %811 = vmatpush1.bf16.msra.mxu0 %v626
    %812 = vmatprep.subr.bf16.mxu0 0
    %813 = vmatpush1.bf16.msra.mxu0 %v625
    %814 = vmatprep.subr.bf16.mxu0 0
    %815 = vmatpush1.bf16.msra.mxu0 %v624
    %816 = vmatprep.subr.bf16.mxu0 0
    %817 = vmatpush1.bf16.msra.mxu0 %v623
    %818 = vmatprep.subr.bf16.mxu0 0
    %819 = vmatpush1.bf16.msra.mxu0 %v622
    %820 = vmatprep.subr.bf16.mxu0 0
    %821 = vmatpush2.bf16.msra.mxu0 %v637
    %822 = vmatprep.subr.bf16.mxu0 0
    %823 = vmatpush2.bf16.msra.mxu0 %v636
    %824 = vmatprep.subr.bf16.mxu0 0
    %825 = vmatpush2.bf16.msra.mxu0 %v635
    %826 = vmatprep.subr.bf16.mxu0 0
    %827 = vmatpush2.bf16.msra.mxu0 %v634
    %828 = vmatprep.subr.bf16.mxu0 0
    %829 = vmatpush2.bf16.msra.mxu0 %v633
    %830 = vmatprep.subr.bf16.mxu0 0
    %831 = vmatpush2.bf16.msra.mxu0 %v632
    %832 = vmatprep.subr.bf16.mxu0 0
    %833 = vmatpush2.bf16.msra.mxu0 %v631
    %834 = vmatprep.subr.bf16.mxu0 0
    %835 = vmatpush2.bf16.msra.mxu0 %v630
    %836 = vmatprep.mubr.bf16.mxu0 %v741
    %837 = vmatmul.mubr.bf16.gmra.mxu0 %v740
    %v838 = vpop.f32.mrf.mxu0
    %v839 = vadd.f32 %v642, %v838
    %v840 = vpop.f32.mrf.mxu0
    %v841 = vpop.f32.mrf.mxu0
    %v842 = vadd.f32 %v642, %v841
    %v843 = vpop.f32.mrf.mxu0
    %844 = vmatprep.mubr.bf16.mxu0 %v743
    %845 = vmatmul.mubr.bf16.gmra.mxu0 %v742
    %v846 = vpop.f32.mrf.mxu0
    %v847 = vadd.f32 %v642, %v846
    %v848 = vpop.f32.mrf.mxu0
    %v849 = vpop.f32.mrf.mxu0
    %v850 = vadd.f32 %v642, %v849
    %v851 = vpop.f32.mrf.mxu0
    %852 = vmatprep.mubr.bf16.mxu0 %v745
    %853 = vmatmul.mubr.bf16.gmra.mxu0 %v744
    %v854 = vpop.f32.mrf.mxu0
    %v855 = vadd.f32 %v642, %v854
    %v856 = vpop.f32.mrf.mxu0
    %v857 = vpop.f32.mrf.mxu0
    %v858 = vadd.f32 %v642, %v857
    %v859 = vpop.f32.mrf.mxu0
    %860 = vmatprep.mubr.bf16.mxu0 %v747
    %861 = vmatmul.mubr.bf16.gmra.mxu0 %v746
    %v862 = vpop.f32.mrf.mxu0
    %v863 = vadd.f32 %v642, %v862
    %v864 = vpop.f32.mrf.mxu0
    %v865 = vpop.f32.mrf.mxu0
    %v866 = vadd.f32 %v642, %v865
    %v867 = vpop.f32.mrf.mxu0
    %868 = vmatprep.mubr.bf16.mxu0 %v749
    %869 = vmatmul.mubr.bf16.gmra.mxu0 %v748
    %v870 = vpop.f32.mrf.mxu0
    %v871 = vadd.f32 %v642, %v870
    %v872 = vpop.f32.mrf.mxu0
    %v873 = vpop.f32.mrf.mxu0
    %v874 = vadd.f32 %v642, %v873
    %v875 = vpop.f32.mrf.mxu0
    %876 = vmatprep.mubr.bf16.mxu0 %v751
    %877 = vmatmul.mubr.bf16.gmra.mxu0 %v750
    %v878 = vpop.f32.mrf.mxu0
    %v879 = vadd.f32 %v642, %v878
    %v880 = vpop.f32.mrf.mxu0
    %v881 = vpop.f32.mrf.mxu0
    %v882 = vadd.f32 %v642, %v881
    %v883 = vpop.f32.mrf.mxu0
    %884 = vmatprep.mubr.bf16.mxu0 %v753
    %885 = vmatmul.mubr.bf16.gmra.mxu0 %v752
    %v886 = vpop.f32.mrf.mxu0
    %v887 = vadd.f32 %v642, %v886
    %v888 = vpop.f32.mrf.mxu0
    %v889 = vpop.f32.mrf.mxu0
    %v890 = vadd.f32 %v642, %v889
    %v891 = vpop.f32.mrf.mxu0
    %892 = vmatprep.mubr.bf16.mxu0 %v755
    %893 = vmatmul.mubr.bf16.gmra.mxu0 %v754
    %v894 = vpop.f32.mrf.mxu0
    %v895 = vadd.f32 %v642, %v894
    %v896 = vpop.f32.mrf.mxu0
    %v897 = vpop.f32.mrf.mxu0
    %v898 = vadd.f32 %v642, %v897
    %v899 = vpop.f32.mrf.mxu0
    %900 = vmatprep.mubr.bf16.mxu0 %v757
    %901 = vmatmul.mubr.bf16.gmra.mxu0 %v756
    %v902 = vpop.f32.mrf.mxu0
    %v903 = vadd.f32 %v642, %v902
    %v904 = vpop.f32.mrf.mxu0
    %v905 = vpop.f32.mrf.mxu0
    %v906 = vadd.f32 %v642, %v905
    %v907 = vpop.f32.mrf.mxu0
    %908 = vmatprep.mubr.bf16.mxu0 %v759
    %909 = vmatmul.mubr.bf16.gmra.mxu0 %v758
    %v910 = vpop.f32.mrf.mxu0
    %v911 = vadd.f32 %v642, %v910
    %v912 = vpop.f32.mrf.mxu0
    %v913 = vpop.f32.mrf.mxu0
    %v914 = vadd.f32 %v642, %v913
    %v915 = vpop.f32.mrf.mxu0
    %916 = vmatprep.mubr.bf16.mxu0 %v761
    %917 = vmatmul.mubr.bf16.gmra.mxu0 %v760
    %v918 = vpop.f32.mrf.mxu0
    %v919 = vadd.f32 %v642, %v918
    %v920 = vpop.f32.mrf.mxu0
    %v921 = vpop.f32.mrf.mxu0
    %v922 = vadd.f32 %v642, %v921
    %v923 = vpop.f32.mrf.mxu0
    %924 = vmatprep.mubr.bf16.mxu0 %v763
    %925 = vmatmul.mubr.bf16.gmra.mxu0 %v762
    %v926 = vpop.f32.mrf.mxu0
    %v927 = vadd.f32 %v642, %v926
    %v928 = vpop.f32.mrf.mxu0
    %v929 = vpop.f32.mrf.mxu0
    %v930 = vadd.f32 %v642, %v929
    %v931 = vpop.f32.mrf.mxu0
    %932 = vmatprep.mubr.bf16.mxu0 %v765
    %933 = vmatmul.mubr.bf16.gmra.mxu0 %v764
    %v934 = vpop.f32.mrf.mxu0
    %v935 = vadd.f32 %v642, %v934
    %v936 = vpop.f32.mrf.mxu0
    %v937 = vpop.f32.mrf.mxu0
    %v938 = vadd.f32 %v642, %v937
    %v939 = vpop.f32.mrf.mxu0
    %940 = vmatprep.mubr.bf16.mxu0 %v767
    %941 = vmatmul.mubr.bf16.gmra.mxu0 %v766
    %v942 = vpop.f32.mrf.mxu0
    %v943 = vadd.f32 %v642, %v942
    %v944 = vpop.f32.mrf.mxu0
    %v945 = vpop.f32.mrf.mxu0
    %v946 = vadd.f32 %v642, %v945
    %v947 = vpop.f32.mrf.mxu0
    %948 = vmatprep.mubr.bf16.mxu0 %v769
    %949 = vmatmul.mubr.bf16.gmra.mxu0 %v768
    %v950 = vpop.f32.mrf.mxu0
    %v951 = vadd.f32 %v642, %v950
    %v952 = vpop.f32.mrf.mxu0
    %v953 = vpop.f32.mrf.mxu0
    %v954 = vadd.f32 %v642, %v953
    %v955 = vpop.f32.mrf.mxu0
    %956 = vmatprep.mubr.bf16.mxu0 %v771
    %957 = vmatmul.mubr.bf16.gmra.mxu0 %v770
    %v958 = vpop.f32.mrf.mxu0
    %v959 = vadd.f32 %v642, %v958
    %v960 = vpop.f32.mrf.mxu0
    %v961 = vpop.f32.mrf.mxu0
    %v962 = vadd.f32 %v642, %v961
    %v963 = vpop.f32.mrf.mxu0
    %964 = vdwg.mxu0
    %v965 = vmax.f32 %v839, 0.0
    %v966 = vmax.f32 %v842, 0.0
    %v967 = vmax.f32 %v847, 0.0
    %v968 = vmax.f32 %v850, 0.0
    %v969 = vmax.f32 %v855, 0.0
    %v970 = vmax.f32 %v858, 0.0
    %v971 = vmax.f32 %v863, 0.0
    %v972 = vmax.f32 %v866, 0.0
    %v973 = vmax.f32 %v871, 0.0
    %v974 = vmax.f32 %v874, 0.0
    %v975 = vmax.f32 %v879, 0.0
    %v976 = vmax.f32 %v882, 0.0
    %v977 = vmax.f32 %v887, 0.0
    %v978 = vmax.f32 %v890, 0.0
    %v979 = vmax.f32 %v895, 0.0
    %v980 = vmax.f32 %v898, 0.0
    %v981 = vmax.f32 %v903, 0.0
    %v982 = vmax.f32 %v906, 0.0
    %v983 = vmax.f32 %v911, 0.0
    %v984 = vmax.f32 %v914, 0.0
    %v985 = vmax.f32 %v919, 0.0
    %v986 = vmax.f32 %v922, 0.0
    %v987 = vmax.f32 %v927, 0.0
    %v988 = vmax.f32 %v930, 0.0
    %v989 = vmax.f32 %v935, 0.0
    %v990 = vmax.f32 %v938, 0.0
    %v991 = vmax.f32 %v943, 0.0
    %v992 = vmax.f32 %v946, 0.0
    %v993 = vmax.f32 %v951, 0.0
    %v994 = vmax.f32 %v954, 0.0
    %v995 = vmax.f32 %v959, 0.0
    %v996 = vmax.f32 %v962, 0.0
    %v997 = vpack.c.bf16 %v966, %v965
    %v998 = vpack.c.bf16 %v968, %v967
    %v999 = vpack.c.bf16 %v970, %v969
    %v1000 = vpack.c.bf16 %v972, %v971
    %v1001 = vpack.c.bf16 %v974, %v973
    %v1002 = vpack.c.bf16 %v976, %v975
    %v1003 = vpack.c.bf16 %v978, %v977
    %v1004 = vpack.c.bf16 %v980, %v979
    %v1005 = vpack.c.bf16 %v982, %v981
    %v1006 = vpack.c.bf16 %v984, %v983
    %v1007 = vpack.c.bf16 %v986, %v985
    %v1008 = vpack.c.bf16 %v988, %v987
    %v1009 = vpack.c.bf16 %v990, %v989
    %v1010 = vpack.c.bf16 %v992, %v991
    %v1011 = vpack.c.bf16 %v994, %v993
    %v1012 = vpack.c.bf16 %v996, %v995
    %v1013 = vld [vmem:[#allocation14] sm:$0xff]
    %v1014 = vld [vmem:[#allocation14 + $0x8] sm:$0xff]
    %v1015 = vld [vmem:[#allocation14 + $0x10] sm:$0xff]
    %v1016 = vld [vmem:[#allocation14 + $0x18] sm:$0xff]
    %v1017 = vld [vmem:[#allocation14 + $0x20] sm:$0xff]
    %v1018 = vld [vmem:[#allocation14 + $0x28] sm:$0xff]
    %v1019 = vld [vmem:[#allocation14 + $0x30] sm:$0xff]
    %v1020 = vld [vmem:[#allocation14 + $0x38] sm:$0xff]
    %v1021 = vld [vmem:[#allocation14 + $0x40] sm:$0xff]
    %v1022 = vld [vmem:[#allocation14 + $0x48] sm:$0xff]
    %v1023 = vld [vmem:[#allocation14 + $0x50] sm:$0xff]
    %v1024 = vld [vmem:[#allocation14 + $0x58] sm:$0xff]
    %v1025 = vld [vmem:[#allocation14 + $0x60] sm:$0xff]
    %v1026 = vld [vmem:[#allocation14 + $0x68] sm:$0xff]
    %v1027 = vld [vmem:[#allocation14 + $0x70] sm:$0xff]
    %v1028 = vld [vmem:[#allocation14 + $0x78] sm:$0xff]
    %v1029 = vld [vmem:[%s12] sm:$0x1]
    %v1046 = vunpack.c.l.b16 %v1013
    %v1047 = vunpack.c.h.b16 %v1013
    %v1048 = vunpack.c.l.b16 %v1014
    %v1049 = vunpack.c.h.b16 %v1014
    %v1050 = vunpack.c.l.b16 %v1015
    %v1051 = vunpack.c.h.b16 %v1015
    %v1052 = vunpack.c.l.b16 %v1016
    %v1053 = vunpack.c.h.b16 %v1016
    %v1054 = vunpack.c.l.b16 %v1017
    %v1055 = vunpack.c.h.b16 %v1017
    %v1056 = vunpack.c.l.b16 %v1018
    %v1057 = vunpack.c.h.b16 %v1018
    %v1058 = vunpack.c.l.b16 %v1019
    %v1059 = vunpack.c.h.b16 %v1019
    %v1060 = vunpack.c.l.b16 %v1020
    %v1061 = vunpack.c.h.b16 %v1020
    %v1062 = vunpack.c.l.b16 %v1021
    %v1063 = vunpack.c.h.b16 %v1021
    %v1064 = vunpack.c.l.b16 %v1022
    %v1065 = vunpack.c.h.b16 %v1022
    %v1066 = vunpack.c.l.b16 %v1023
    %v1067 = vunpack.c.h.b16 %v1023
    %v1068 = vunpack.c.l.b16 %v1024
    %v1069 = vunpack.c.h.b16 %v1024
    %v1070 = vunpack.c.l.b16 %v1025
    %v1071 = vunpack.c.h.b16 %v1025
    %v1072 = vunpack.c.l.b16 %v1026
    %v1073 = vunpack.c.h.b16 %v1026
    %v1074 = vunpack.c.l.b16 %v1027
    %v1075 = vunpack.c.h.b16 %v1027
    %v1076 = vunpack.c.l.b16 %v1028
    %v1077 = vunpack.c.h.b16 %v1028
    %v1078 = vpack.c.b16 %v1048, %v1046
    %v1079 = vpack.c.b16 %v1049, %v1047
    %v1080 = vpack.c.b16 %v1052, %v1050
    %v1081 = vpack.c.b16 %v1053, %v1051
    %v1082 = vpack.c.b16 %v1056, %v1054
    %v1083 = vpack.c.b16 %v1057, %v1055
    %v1084 = vpack.c.b16 %v1060, %v1058
    %v1085 = vpack.c.b16 %v1061, %v1059
    %v1086 = vpack.c.b16 %v1064, %v1062
    %v1087 = vpack.c.b16 %v1065, %v1063
    %v1088 = vpack.c.b16 %v1068, %v1066
    %v1089 = vpack.c.b16 %v1069, %v1067
    %v1090 = vpack.c.b16 %v1072, %v1070
    %v1091 = vpack.c.b16 %v1073, %v1071
    %v1092 = vpack.c.b16 %v1076, %v1074
    %v1093 = vpack.c.b16 %v1077, %v1075
    %1110 = vmatprep.subr.bf16.mxu0 %v1093
    %1111 = vmatpush1.bf16.msra.mxu0 %v1092
    %1112 = vmatprep.subr.bf16.mxu0 %v1091
    %1113 = vmatpush1.bf16.msra.mxu0 %v1090
    %1114 = vmatprep.subr.bf16.mxu0 %v1089
    %1115 = vmatpush1.bf16.msra.mxu0 %v1088
    %1116 = vmatprep.subr.bf16.mxu0 %v1087
    %1117 = vmatpush1.bf16.msra.mxu0 %v1086
    %1118 = vmatprep.subr.bf16.mxu0 %v1085
    %1119 = vmatpush1.bf16.msra.mxu0 %v1084
    %1120 = vmatprep.subr.bf16.mxu0 %v1083
    %1121 = vmatpush1.bf16.msra.mxu0 %v1082
    %1122 = vmatprep.subr.bf16.mxu0 %v1081
    %1123 = vmatpush1.bf16.msra.mxu0 %v1080
    %1124 = vmatprep.subr.bf16.mxu0 %v1079
    %1125 = vmatpush1.bf16.msra.mxu0 %v1078
    %1126 = vmatprep.subr.bf16.mxu0 0
    %1127 = vmatpush2.bf16.msra.mxu0 0
    %1128 = vmatprep.subr.bf16.mxu0 0
    %1129 = vmatpush2.bf16.msra.mxu0 0
    %1130 = vmatprep.subr.bf16.mxu0 0
    %1131 = vmatpush2.bf16.msra.mxu0 0
    %1132 = vmatprep.subr.bf16.mxu0 0
    %1133 = vmatpush2.bf16.msra.mxu0 0
    %1134 = vmatprep.subr.bf16.mxu0 0
    %1135 = vmatpush2.bf16.msra.mxu0 0
    %1136 = vmatprep.subr.bf16.mxu0 0
    %1137 = vmatpush2.bf16.msra.mxu0 0
    %1138 = vmatprep.subr.bf16.mxu0 0
    %1139 = vmatpush2.bf16.msra.mxu0 0
    %1140 = vmatprep.subr.bf16.mxu0 0
    %1141 = vmatpush2.bf16.msra.mxu0 0
    %1142 = vmatprep.mubr.bf16.mxu0 0
    %1143 = vmatmul.mubr.bf16.gmra.mxu0 %v997
    %v1144 = vpop.f32.mrf.mxu0
    %v1145 = vadd.f32 0.0, %v1144
    %v1146 = vpop.f32.mrf.mxu0
    %v1147 = vpop.f32.mrf.mxu0
    %v1148 = vadd.f32 0.0, %v1147
    %v1149 = vpop.f32.mrf.mxu0
    %1150 = vmatprep.mubr.bf16.mxu0 0
    %1151 = vmatmul.mubr.bf16.gmra.mxu0 %v998
    %v1152 = vpop.f32.mrf.mxu0
    %v1153 = vadd.f32 0.0, %v1152
    %v1154 = vpop.f32.mrf.mxu0
    %v1155 = vpop.f32.mrf.mxu0
    %v1156 = vadd.f32 0.0, %v1155
    %v1157 = vpop.f32.mrf.mxu0
    %1158 = vmatprep.mubr.bf16.mxu0 0
    %1159 = vmatmul.mubr.bf16.gmra.mxu0 %v999
    %v1160 = vpop.f32.mrf.mxu0
    %v1161 = vadd.f32 0.0, %v1160
    %v1162 = vpop.f32.mrf.mxu0
    %v1163 = vpop.f32.mrf.mxu0
    %v1164 = vadd.f32 0.0, %v1163
    %v1165 = vpop.f32.mrf.mxu0
    %1166 = vmatprep.mubr.bf16.mxu0 0
    %1167 = vmatmul.mubr.bf16.gmra.mxu0 %v1000
    %v1168 = vpop.f32.mrf.mxu0
    %v1169 = vadd.f32 0.0, %v1168
    %v1170 = vpop.f32.mrf.mxu0
    %v1171 = vpop.f32.mrf.mxu0
    %v1172 = vadd.f32 0.0, %v1171
    %v1173 = vpop.f32.mrf.mxu0
    %1174 = vmatprep.mubr.bf16.mxu0 0
    %1175 = vmatmul.mubr.bf16.gmra.mxu0 %v1001
    %v1176 = vpop.f32.mrf.mxu0
    %v1177 = vadd.f32 0.0, %v1176
    %v1178 = vpop.f32.mrf.mxu0
    %v1179 = vpop.f32.mrf.mxu0
    %v1180 = vadd.f32 0.0, %v1179
    %v1181 = vpop.f32.mrf.mxu0
    %1182 = vmatprep.mubr.bf16.mxu0 0
    %1183 = vmatmul.mubr.bf16.gmra.mxu0 %v1002
    %v1184 = vpop.f32.mrf.mxu0
    %v1185 = vadd.f32 0.0, %v1184
    %v1186 = vpop.f32.mrf.mxu0
    %v1187 = vpop.f32.mrf.mxu0
    %v1188 = vadd.f32 0.0, %v1187
    %v1189 = vpop.f32.mrf.mxu0
    %1190 = vmatprep.mubr.bf16.mxu0 0
    %1191 = vmatmul.mubr.bf16.gmra.mxu0 %v1003
    %v1192 = vpop.f32.mrf.mxu0
    %v1193 = vadd.f32 0.0, %v1192
    %v1194 = vpop.f32.mrf.mxu0
    %v1195 = vpop.f32.mrf.mxu0
    %v1196 = vadd.f32 0.0, %v1195
    %v1197 = vpop.f32.mrf.mxu0
    %1198 = vmatprep.mubr.bf16.mxu0 0
    %1199 = vmatmul.mubr.bf16.gmra.mxu0 %v1004
    %v1200 = vpop.f32.mrf.mxu0
    %v1201 = vadd.f32 0.0, %v1200
    %v1202 = vpop.f32.mrf.mxu0
    %v1203 = vpop.f32.mrf.mxu0
    %v1204 = vadd.f32 0.0, %v1203
    %v1205 = vpop.f32.mrf.mxu0
    %1206 = vmatprep.mubr.bf16.mxu0 0
    %1207 = vmatmul.mubr.bf16.gmra.mxu0 %v1005
    %v1208 = vpop.f32.mrf.mxu0
    %v1209 = vadd.f32 0.0, %v1208
    %v1210 = vpop.f32.mrf.mxu0
    %v1211 = vpop.f32.mrf.mxu0
    %v1212 = vadd.f32 0.0, %v1211
    %v1213 = vpop.f32.mrf.mxu0
    %1214 = vmatprep.mubr.bf16.mxu0 0
    %1215 = vmatmul.mubr.bf16.gmra.mxu0 %v1006
    %v1216 = vpop.f32.mrf.mxu0
    %v1217 = vadd.f32 0.0, %v1216
    %v1218 = vpop.f32.mrf.mxu0
    %v1219 = vpop.f32.mrf.mxu0
    %v1220 = vadd.f32 0.0, %v1219
    %v1221 = vpop.f32.mrf.mxu0
    %1222 = vmatprep.mubr.bf16.mxu0 0
    %1223 = vmatmul.mubr.bf16.gmra.mxu0 %v1007
    %v1224 = vpop.f32.mrf.mxu0
    %v1225 = vadd.f32 0.0, %v1224
    %v1226 = vpop.f32.mrf.mxu0
    %v1227 = vpop.f32.mrf.mxu0
    %v1228 = vadd.f32 0.0, %v1227
    %v1229 = vpop.f32.mrf.mxu0
    %1230 = vmatprep.mubr.bf16.mxu0 0
    %1231 = vmatmul.mubr.bf16.gmra.mxu0 %v1008
    %v1232 = vpop.f32.mrf.mxu0
    %v1233 = vadd.f32 0.0, %v1232
    %v1234 = vpop.f32.mrf.mxu0
    %v1235 = vpop.f32.mrf.mxu0
    %v1236 = vadd.f32 0.0, %v1235
    %v1237 = vpop.f32.mrf.mxu0
    %1238 = vmatprep.mubr.bf16.mxu0 0
    %1239 = vmatmul.mubr.bf16.gmra.mxu0 %v1009
    %v1240 = vpop.f32.mrf.mxu0
    %v1241 = vadd.f32 0.0, %v1240
    %v1242 = vpop.f32.mrf.mxu0
    %v1243 = vpop.f32.mrf.mxu0
    %v1244 = vadd.f32 0.0, %v1243
    %v1245 = vpop.f32.mrf.mxu0
    %1246 = vmatprep.mubr.bf16.mxu0 0
    %1247 = vmatmul.mubr.bf16.gmra.mxu0 %v1010
    %v1248 = vpop.f32.mrf.mxu0
    %v1249 = vadd.f32 0.0, %v1248
    %v1250 = vpop.f32.mrf.mxu0
    %v1251 = vpop.f32.mrf.mxu0
    %v1252 = vadd.f32 0.0, %v1251
    %v1253 = vpop.f32.mrf.mxu0
    %1254 = vmatprep.mubr.bf16.mxu0 0
    %1255 = vmatmul.mubr.bf16.gmra.mxu0 %v1011
    %v1256 = vpop.f32.mrf.mxu0
    %v1257 = vadd.f32 0.0, %v1256
    %v1258 = vpop.f32.mrf.mxu0
    %v1259 = vpop.f32.mrf.mxu0
    %v1260 = vadd.f32 0.0, %v1259
    %v1261 = vpop.f32.mrf.mxu0
    %1262 = vmatprep.mubr.bf16.mxu0 0
    %1263 = vmatmul.mubr.bf16.gmra.mxu0 %v1012
    %v1264 = vpop.f32.mrf.mxu0
    %v1265 = vadd.f32 0.0, %v1264
    %v1266 = vpop.f32.mrf.mxu0
    %v1267 = vpop.f32.mrf.mxu0
    %v1268 = vadd.f32 0.0, %v1267
    %v1269 = vpop.f32.mrf.mxu0
    %1270 = vdwg.mxu0
    %v1271 = vpack.c.bf16 %v1148, %v1145
    %v1272 = vpack.c.bf16 %v1156, %v1153
    %v1273 = vpack.c.bf16 %v1164, %v1161
    %v1274 = vpack.c.bf16 %v1172, %v1169
    %v1275 = vpack.c.bf16 %v1180, %v1177
    %v1276 = vpack.c.bf16 %v1188, %v1185
    %v1277 = vpack.c.bf16 %v1196, %v1193
    %v1278 = vpack.c.bf16 %v1204, %v1201
    %v1279 = vpack.c.bf16 %v1212, %v1209
    %v1280 = vpack.c.bf16 %v1220, %v1217
    %v1281 = vpack.c.bf16 %v1228, %v1225
    %v1282 = vpack.c.bf16 %v1236, %v1233
    %v1283 = vpack.c.bf16 %v1244, %v1241
    %v1284 = vpack.c.bf16 %v1252, %v1249
    %v1285 = vpack.c.bf16 %v1260, %v1257
    %v1286 = vpack.c.bf16 %v1268, %v1265
    %v1288 = vlaneseq
    %v1289 = vshrl.u32 %v1288, 7
    %v1290 = vsub.s32 0, %v1289
    %v1291 = vrot.slane %v1029, %v1290
    %1293 = vmatprep.subr.bf16.mxu0 0
    %1294 = vmatpush1.bf16.msra.mxu0 %v1278
    %1295 = vmatprep.subr.bf16.mxu0 0
    %1296 = vmatpush1.bf16.msra.mxu0 %v1277
    %1297 = vmatprep.subr.bf16.mxu0 0
    %1298 = vmatpush1.bf16.msra.mxu0 %v1276
    %1299 = vmatprep.subr.bf16.mxu0 0
    %1300 = vmatpush1.bf16.msra.mxu0 %v1275
    %1301 = vmatprep.subr.bf16.mxu0 0
    %1302 = vmatpush1.bf16.msra.mxu0 %v1274
    %1303 = vmatprep.subr.bf16.mxu0 0
    %1304 = vmatpush1.bf16.msra.mxu0 %v1273
    %1305 = vmatprep.subr.bf16.mxu0 0
    %1306 = vmatpush1.bf16.msra.mxu0 %v1272
    %1307 = vmatprep.subr.bf16.mxu0 0
    %1308 = vmatpush1.bf16.msra.mxu0 %v1271
    %1309 = vmatprep.subr.bf16.mxu0 0
    %1310 = vmatpush2.bf16.msra.mxu0 %v1286
    %1311 = vmatprep.subr.bf16.mxu0 0
    %1312 = vmatpush2.bf16.msra.mxu0 %v1285
    %1313 = vmatprep.subr.bf16.mxu0 0
    %1314 = vmatpush2.bf16.msra.mxu0 %v1284
    %1315 = vmatprep.subr.bf16.mxu0 0
    %1316 = vmatpush2.bf16.msra.mxu0 %v1283
    %1317 = vmatprep.subr.bf16.mxu0 0
    %1318 = vmatpush2.bf16.msra.mxu0 %v1282
    %1319 = vmatprep.subr.bf16.mxu0 0
    %1320 = vmatpush2.bf16.msra.mxu0 %v1281
    %1321 = vmatprep.subr.bf16.mxu0 0
    %1322 = vmatpush2.bf16.msra.mxu0 %v1280
    %1323 = vmatprep.subr.bf16.mxu0 0
    %1324 = vmatpush2.bf16.msra.mxu0 %v1279
    %1325 = vmatprep.mubr.bf16.mxu0 %v741
    %1326 = vmatmul.mubr.bf16.gmra.mxu0 %v740
    %v1327 = vpop.f32.mrf.mxu0
    %v1328 = vadd.f32 %v1291, %v1327
    %v1329 = vpop.f32.mrf.mxu0
    %v1330 = vpop.f32.mrf.mxu0
    %v1331 = vadd.f32 %v1291, %v1330
    %v1332 = vpop.f32.mrf.mxu0
    %1333 = vmatprep.mubr.bf16.mxu0 %v743
    %1334 = vmatmul.mubr.bf16.gmra.mxu0 %v742
    %v1335 = vpop.f32.mrf.mxu0
    %v1336 = vadd.f32 %v1291, %v1335
    %v1337 = vpop.f32.mrf.mxu0
    %v1338 = vpop.f32.mrf.mxu0
    %v1339 = vadd.f32 %v1291, %v1338
    %v1340 = vpop.f32.mrf.mxu0
    %1341 = vmatprep.mubr.bf16.mxu0 %v745
    %1342 = vmatmul.mubr.bf16.gmra.mxu0 %v744
    %v1343 = vpop.f32.mrf.mxu0
    %v1344 = vadd.f32 %v1291, %v1343
    %v1345 = vpop.f32.mrf.mxu0
    %v1346 = vpop.f32.mrf.mxu0
    %v1347 = vadd.f32 %v1291, %v1346
    %v1348 = vpop.f32.mrf.mxu0
    %1349 = vmatprep.mubr.bf16.mxu0 %v747
    %1350 = vmatmul.mubr.bf16.gmra.mxu0 %v746
    %v1351 = vpop.f32.mrf.mxu0
    %v1352 = vadd.f32 %v1291, %v1351
    %v1353 = vpop.f32.mrf.mxu0
    %v1354 = vpop.f32.mrf.mxu0
    %v1355 = vadd.f32 %v1291, %v1354
    %v1356 = vpop.f32.mrf.mxu0
    %1357 = vmatprep.mubr.bf16.mxu0 %v749
    %1358 = vmatmul.mubr.bf16.gmra.mxu0 %v748
    %v1359 = vpop.f32.mrf.mxu0
    %v1360 = vadd.f32 %v1291, %v1359
    %v1361 = vpop.f32.mrf.mxu0
    %v1362 = vpop.f32.mrf.mxu0
    %v1363 = vadd.f32 %v1291, %v1362
    %v1364 = vpop.f32.mrf.mxu0
    %1365 = vmatprep.mubr.bf16.mxu0 %v751
    %1366 = vmatmul.mubr.bf16.gmra.mxu0 %v750
    %v1367 = vpop.f32.mrf.mxu0
    %v1368 = vadd.f32 %v1291, %v1367
    %v1369 = vpop.f32.mrf.mxu0
    %v1370 = vpop.f32.mrf.mxu0
    %v1371 = vadd.f32 %v1291, %v1370
    %v1372 = vpop.f32.mrf.mxu0
    %1373 = vmatprep.mubr.bf16.mxu0 %v753
    %1374 = vmatmul.mubr.bf16.gmra.mxu0 %v752
    %v1375 = vpop.f32.mrf.mxu0
    %v1376 = vadd.f32 %v1291, %v1375
    %v1377 = vpop.f32.mrf.mxu0
    %v1378 = vpop.f32.mrf.mxu0
    %v1379 = vadd.f32 %v1291, %v1378
    %v1380 = vpop.f32.mrf.mxu0
    %1381 = vmatprep.mubr.bf16.mxu0 %v755
    %1382 = vmatmul.mubr.bf16.gmra.mxu0 %v754
    %v1383 = vpop.f32.mrf.mxu0
    %v1384 = vadd.f32 %v1291, %v1383
    %v1385 = vpop.f32.mrf.mxu0
    %v1386 = vpop.f32.mrf.mxu0
    %v1387 = vadd.f32 %v1291, %v1386
    %v1388 = vpop.f32.mrf.mxu0
    %1389 = vmatprep.mubr.bf16.mxu0 %v757
    %1390 = vmatmul.mubr.bf16.gmra.mxu0 %v756
    %v1391 = vpop.f32.mrf.mxu0
    %v1392 = vadd.f32 %v1291, %v1391
    %v1393 = vpop.f32.mrf.mxu0
    %v1394 = vpop.f32.mrf.mxu0
    %v1395 = vadd.f32 %v1291, %v1394
    %v1396 = vpop.f32.mrf.mxu0
    %1397 = vmatprep.mubr.bf16.mxu0 %v759
    %1398 = vmatmul.mubr.bf16.gmra.mxu0 %v758
    %v1399 = vpop.f32.mrf.mxu0
    %v1400 = vadd.f32 %v1291, %v1399
    %v1401 = vpop.f32.mrf.mxu0
    %v1402 = vpop.f32.mrf.mxu0
    %v1403 = vadd.f32 %v1291, %v1402
    %v1404 = vpop.f32.mrf.mxu0
    %1405 = vmatprep.mubr.bf16.mxu0 %v761
    %1406 = vmatmul.mubr.bf16.gmra.mxu0 %v760
    %v1407 = vpop.f32.mrf.mxu0
    %v1408 = vadd.f32 %v1291, %v1407
    %v1409 = vpop.f32.mrf.mxu0
    %v1410 = vpop.f32.mrf.mxu0
    %v1411 = vadd.f32 %v1291, %v1410
    %v1412 = vpop.f32.mrf.mxu0
    %1413 = vmatprep.mubr.bf16.mxu0 %v763
    %1414 = vmatmul.mubr.bf16.gmra.mxu0 %v762
    %v1415 = vpop.f32.mrf.mxu0
    %v1416 = vadd.f32 %v1291, %v1415
    %v1417 = vpop.f32.mrf.mxu0
    %v1418 = vpop.f32.mrf.mxu0
    %v1419 = vadd.f32 %v1291, %v1418
    %v1420 = vpop.f32.mrf.mxu0
    %1421 = vmatprep.mubr.bf16.mxu0 %v765
    %1422 = vmatmul.mubr.bf16.gmra.mxu0 %v764
    %v1423 = vpop.f32.mrf.mxu0
    %v1424 = vadd.f32 %v1291, %v1423
    %v1425 = vpop.f32.mrf.mxu0
    %v1426 = vpop.f32.mrf.mxu0
    %v1427 = vadd.f32 %v1291, %v1426
    %v1428 = vpop.f32.mrf.mxu0
    %1429 = vmatprep.mubr.bf16.mxu0 %v767
    %1430 = vmatmul.mubr.bf16.gmra.mxu0 %v766
    %v1431 = vpop.f32.mrf.mxu0
    %v1432 = vadd.f32 %v1291, %v1431
    %v1433 = vpop.f32.mrf.mxu0
    %v1434 = vpop.f32.mrf.mxu0
    %v1435 = vadd.f32 %v1291, %v1434
    %v1436 = vpop.f32.mrf.mxu0
    %1437 = vmatprep.mubr.bf16.mxu0 %v769
    %1438 = vmatmul.mubr.bf16.gmra.mxu0 %v768
    %v1439 = vpop.f32.mrf.mxu0
    %v1440 = vadd.f32 %v1291, %v1439
    %v1441 = vpop.f32.mrf.mxu0
    %v1442 = vpop.f32.mrf.mxu0
    %v1443 = vadd.f32 %v1291, %v1442
    %v1444 = vpop.f32.mrf.mxu0
    %1445 = vmatprep.mubr.bf16.mxu0 %v771
    %1446 = vmatmul.mubr.bf16.gmra.mxu0 %v770
    %v1447 = vpop.f32.mrf.mxu0
    %v1448 = vadd.f32 %v1291, %v1447
    %v1449 = vpop.f32.mrf.mxu0
    %v1450 = vpop.f32.mrf.mxu0
    %v1451 = vadd.f32 %v1291, %v1450
    %v1452 = vpop.f32.mrf.mxu0
    %1453 = vdwg.mxu0
    %v1454 = vmax.f32 %v1328, 0.0
    %v1455 = vmax.f32 %v1331, 0.0
    %v1456 = vmax.f32 %v1336, 0.0
    %v1457 = vmax.f32 %v1339, 0.0
    %v1458 = vmax.f32 %v1344, 0.0
    %v1459 = vmax.f32 %v1347, 0.0
    %v1460 = vmax.f32 %v1352, 0.0
    %v1461 = vmax.f32 %v1355, 0.0
    %v1462 = vmax.f32 %v1360, 0.0
    %v1463 = vmax.f32 %v1363, 0.0
    %v1464 = vmax.f32 %v1368, 0.0
    %v1465 = vmax.f32 %v1371, 0.0
    %v1466 = vmax.f32 %v1376, 0.0
    %v1467 = vmax.f32 %v1379, 0.0
    %v1468 = vmax.f32 %v1384, 0.0
    %v1469 = vmax.f32 %v1387, 0.0
    %v1470 = vmax.f32 %v1392, 0.0
    %v1471 = vmax.f32 %v1395, 0.0
    %v1472 = vmax.f32 %v1400, 0.0
    %v1473 = vmax.f32 %v1403, 0.0
    %v1474 = vmax.f32 %v1408, 0.0
    %v1475 = vmax.f32 %v1411, 0.0
    %v1476 = vmax.f32 %v1416, 0.0
    %v1477 = vmax.f32 %v1419, 0.0
    %v1478 = vmax.f32 %v1424, 0.0
    %v1479 = vmax.f32 %v1427, 0.0
    %v1480 = vmax.f32 %v1432, 0.0
    %v1481 = vmax.f32 %v1435, 0.0
    %v1482 = vmax.f32 %v1440, 0.0
    %v1483 = vmax.f32 %v1443, 0.0
    %v1484 = vmax.f32 %v1448, 0.0
    %v1485 = vmax.f32 %v1451, 0.0
    %v1486 = vpack.c.bf16 %v1455, %v1454
    %v1487 = vpack.c.bf16 %v1457, %v1456
    %v1488 = vpack.c.bf16 %v1459, %v1458
    %v1489 = vpack.c.bf16 %v1461, %v1460
    %v1490 = vpack.c.bf16 %v1463, %v1462
    %v1491 = vpack.c.bf16 %v1465, %v1464
    %v1492 = vpack.c.bf16 %v1467, %v1466
    %v1493 = vpack.c.bf16 %v1469, %v1468
    %v1494 = vpack.c.bf16 %v1471, %v1470
    %v1495 = vpack.c.bf16 %v1473, %v1472
    %v1496 = vpack.c.bf16 %v1475, %v1474
    %v1497 = vpack.c.bf16 %v1477, %v1476
    %v1498 = vpack.c.bf16 %v1479, %v1478
    %v1499 = vpack.c.bf16 %v1481, %v1480
    %v1500 = vpack.c.bf16 %v1483, %v1482
    %v1501 = vpack.c.bf16 %v1485, %v1484
    %v1502 = vld [vmem:[#allocation8] sm:$0xff]
    %v1504 = vunpack.c.l.b16 %v1502
    %v1505 = vunpack.c.h.b16 %v1502
    %v1506 = vpack.c.b16 %v1504, %v1504
    %v1507 = vpack.c.b16 %v1505, %v1505
    %1510 = vmatprep.subr.bf16.mxu0 0
    %1511 = vmatpush1.bf16.msra.mxu0 %v1493
    %1512 = vmatprep.subr.bf16.mxu0 0
    %1513 = vmatpush1.bf16.msra.mxu0 %v1492
    %1514 = vmatprep.subr.bf16.mxu0 0
    %1515 = vmatpush1.bf16.msra.mxu0 %v1491
    %1516 = vmatprep.subr.bf16.mxu0 0
    %1517 = vmatpush1.bf16.msra.mxu0 %v1490
    %1518 = vmatprep.subr.bf16.mxu0 0
    %1519 = vmatpush1.bf16.msra.mxu0 %v1489
    %1520 = vmatprep.subr.bf16.mxu0 0
    %1521 = vmatpush1.bf16.msra.mxu0 %v1488
    %1522 = vmatprep.subr.bf16.mxu0 0
    %1523 = vmatpush1.bf16.msra.mxu0 %v1487
    %1524 = vmatprep.subr.bf16.mxu0 0
    %1525 = vmatpush1.bf16.msra.mxu0 %v1486
    %1526 = vmatprep.subr.bf16.mxu0 0
    %1527 = vmatpush2.bf16.msra.mxu0 %v1501
    %1528 = vmatprep.subr.bf16.mxu0 0
    %1529 = vmatpush2.bf16.msra.mxu0 %v1500
    %1530 = vmatprep.subr.bf16.mxu0 0
    %1531 = vmatpush2.bf16.msra.mxu0 %v1499
    %1532 = vmatprep.subr.bf16.mxu0 0
    %1533 = vmatpush2.bf16.msra.mxu0 %v1498
    %1534 = vmatprep.subr.bf16.mxu0 0
    %1535 = vmatpush2.bf16.msra.mxu0 %v1497
    %1536 = vmatprep.subr.bf16.mxu0 0
    %1537 = vmatpush2.bf16.msra.mxu0 %v1496
    %1538 = vmatprep.subr.bf16.mxu0 0
    %1539 = vmatpush2.bf16.msra.mxu0 %v1495
    %1540 = vmatprep.subr.bf16.mxu0 0
    %1541 = vmatpush2.bf16.msra.mxu0 %v1494
    %1542 = vmatprep.mubr.bf16.mxu0 %v1507
    %1543 = vmatmul.mubr.bf16.gmra.mxu0 %v1506
    %v1544 = vpop.f32.mrf.mxu0
    %v1545 = vadd.f32 0.0, %v1544
    %v1546 = vpop.f32.mrf.mxu0
    %v1547 = vpop.f32.mrf.mxu0
    %v1548 = vpop.f32.mrf.mxu0
    %1549 = vdwg.mxu0
    %v1550 = vpack.c.bf16 %v1545, %v1545
    %v1551 = vld [vmem:[#allocation17] sm:$0xf]
    %v1552 = vld [vmem:[#allocation17 + $0x4] sm:$0xf]
    %v1553 = vld [vmem:[#allocation17 + $0x8] sm:$0xf]
    %v1554 = vld [vmem:[#allocation17 + $0xc] sm:$0xf]
    %v1555 = vld [vmem:[#allocation17 + $0x10] sm:$0xf]
    %v1556 = vld [vmem:[#allocation17 + $0x14] sm:$0xf]
    %v1557 = vld [vmem:[#allocation17 + $0x18] sm:$0xf]
    %v1558 = vld [vmem:[#allocation17 + $0x1c] sm:$0xf]
    %v1559 = vld [vmem:[#allocation17 + $0x20] sm:$0xf]
    %v1560 = vld [vmem:[#allocation17 + $0x24] sm:$0xf]
    %v1561 = vld [vmem:[#allocation17 + $0x28] sm:$0xf]
    %v1562 = vld [vmem:[#allocation17 + $0x2c] sm:$0xf]
    %v1563 = vld [vmem:[#allocation17 + $0x30] sm:$0xf]
    %v1564 = vld [vmem:[#allocation17 + $0x34] sm:$0xf]
    %v1565 = vld [vmem:[#allocation17 + $0x38] sm:$0xf]
    %v1566 = vld [vmem:[#allocation17 + $0x3c] sm:$0xf]
    %v1567 = vld [vmem:[%s15] sm:$0x1]
    %v1569 = vlaneseq
    %v1570 = vshrl.u32 %v1569, 7
    %v1571 = vsub.s32 0, %v1570
    %v1572 = vrot.slane %v1567, %v1571
    %v1590 = vunpack.c.l.b16 %v1551
    %v1591 = vunpack.c.l.b16 %v1552
    %v1592 = vunpack.c.l.b16 %v1553
    %v1593 = vunpack.c.l.b16 %v1554
    %v1594 = vunpack.c.l.b16 %v1555
    %v1595 = vunpack.c.l.b16 %v1556
    %v1596 = vunpack.c.l.b16 %v1557
    %v1597 = vunpack.c.l.b16 %v1558
    %v1598 = vunpack.c.l.b16 %v1559
    %v1599 = vunpack.c.l.b16 %v1560
    %v1600 = vunpack.c.l.b16 %v1561
    %v1601 = vunpack.c.l.b16 %v1562
    %v1602 = vunpack.c.l.b16 %v1563
    %v1603 = vunpack.c.l.b16 %v1564
    %v1604 = vunpack.c.l.b16 %v1565
    %v1605 = vunpack.c.l.b16 %v1566
    %v1606 = vpack.c.b16 %v1591, %v1590
    %v1607 = vpack.c.b16 %v1593, %v1592
    %v1608 = vpack.c.b16 %v1595, %v1594
    %v1609 = vpack.c.b16 %v1597, %v1596
    %v1610 = vpack.c.b16 %v1599, %v1598
    %v1611 = vpack.c.b16 %v1601, %v1600
    %v1612 = vpack.c.b16 %v1603, %v1602
    %v1613 = vpack.c.b16 %v1605, %v1604
    %1622 = vmatprep.subr.bf16.mxu0 0
    %1623 = vmatpush1.bf16.msra.mxu0 %v1613
    %1624 = vmatprep.subr.bf16.mxu0 0
    %1625 = vmatpush1.bf16.msra.mxu0 %v1612
    %1626 = vmatprep.subr.bf16.mxu0 0
    %1627 = vmatpush1.bf16.msra.mxu0 %v1611
    %1628 = vmatprep.subr.bf16.mxu0 0
    %1629 = vmatpush1.bf16.msra.mxu0 %v1610
    %1630 = vmatprep.subr.bf16.mxu0 0
    %1631 = vmatpush1.bf16.msra.mxu0 %v1609
    %1632 = vmatprep.subr.bf16.mxu0 0
    %1633 = vmatpush1.bf16.msra.mxu0 %v1608
    %1634 = vmatprep.subr.bf16.mxu0 0
    %1635 = vmatpush1.bf16.msra.mxu0 %v1607
    %1636 = vmatprep.subr.bf16.mxu0 0
    %1637 = vmatpush1.bf16.msra.mxu0 %v1606
    %1638 = vmatprep.subr.bf16.mxu0 0
    %1639 = vmatpush2.bf16.msra.mxu0 0
    %1640 = vmatprep.subr.bf16.mxu0 0
    %1641 = vmatpush2.bf16.msra.mxu0 0
    %1642 = vmatprep.subr.bf16.mxu0 0
    %1643 = vmatpush2.bf16.msra.mxu0 0
    %1644 = vmatprep.subr.bf16.mxu0 0
    %1645 = vmatpush2.bf16.msra.mxu0 0
    %1646 = vmatprep.subr.bf16.mxu0 0
    %1647 = vmatpush2.bf16.msra.mxu0 0
    %1648 = vmatprep.subr.bf16.mxu0 0
    %1649 = vmatpush2.bf16.msra.mxu0 0
    %1650 = vmatprep.subr.bf16.mxu0 0
    %1651 = vmatpush2.bf16.msra.mxu0 0
    %1652 = vmatprep.subr.bf16.mxu0 0
    %1653 = vmatpush2.bf16.msra.mxu0 0
    %1654 = vmatprep.mubr.bf16.mxu0 0
    %1655 = vmatmul.mubr.bf16.gmra.mxu0 %v1550
    %v1656 = vpop.f32.mrf.mxu0
    %v1657 = vadd.f32 %v1572, %v1656
    %v1658 = vpop.f32.mrf.mxu0
    %v1659 = vpop.f32.mrf.mxu0
    %v1660 = vpop.f32.mrf.mxu0
    %1661 = vdwg.mxu0
    %v1662 = vmax.f32 %v1657, 0.0
    %v1663 = vpack.c.bf16 %v1662, %v1662
    %v1664 = vld [vmem:[#allocation19] sm:$0xf]
    %v1665 = vld [vmem:[#allocation19 + $0x4] sm:$0xf]
    %v1666 = vld [vmem:[#allocation19 + $0x8] sm:$0xf]
    %v1667 = vld [vmem:[#allocation19 + $0xc] sm:$0xf]
    %v1668 = vld [vmem:[#allocation19 + $0x10] sm:$0xf]
    %v1669 = vld [vmem:[#allocation19 + $0x14] sm:$0xf]
    %v1670 = vld [vmem:[#allocation19 + $0x18] sm:$0xf]
    %v1671 = vld [vmem:[#allocation19 + $0x1c] sm:$0xf]
    %v1672 = vld [vmem:[#allocation19 + $0x20] sm:$0xf]
    %v1673 = vld [vmem:[#allocation19 + $0x24] sm:$0xf]
    %v1674 = vld [vmem:[#allocation19 + $0x28] sm:$0xf]
    %v1675 = vld [vmem:[#allocation19 + $0x2c] sm:$0xf]
    %v1676 = vld [vmem:[#allocation19 + $0x30] sm:$0xf]
    %v1677 = vld [vmem:[#allocation19 + $0x34] sm:$0xf]
    %v1678 = vld [vmem:[#allocation19 + $0x38] sm:$0xf]
    %v1679 = vld [vmem:[#allocation19 + $0x3c] sm:$0xf]
    %v1680 = vld [vmem:[%s17] sm:$0x1]
    %v1682 = vlaneseq
    %v1683 = vshrl.u32 %v1682, 7
    %v1684 = vsub.s32 0, %v1683
    %v1685 = vrot.slane %v1680, %v1684
    %v1703 = vunpack.c.l.b16 %v1664
    %v1704 = vunpack.c.l.b16 %v1665
    %v1705 = vunpack.c.l.b16 %v1666
    %v1706 = vunpack.c.l.b16 %v1667
    %v1707 = vunpack.c.l.b16 %v1668
    %v1708 = vunpack.c.l.b16 %v1669
    %v1709 = vunpack.c.l.b16 %v1670
    %v1710 = vunpack.c.l.b16 %v1671
    %v1711 = vunpack.c.l.b16 %v1672
    %v1712 = vunpack.c.l.b16 %v1673
    %v1713 = vunpack.c.l.b16 %v1674
    %v1714 = vunpack.c.l.b16 %v1675
    %v1715 = vunpack.c.l.b16 %v1676
    %v1716 = vunpack.c.l.b16 %v1677
    %v1717 = vunpack.c.l.b16 %v1678
    %v1718 = vunpack.c.l.b16 %v1679
    %v1719 = vpack.c.b16 %v1704, %v1703
    %v1720 = vpack.c.b16 %v1706, %v1705
    %v1721 = vpack.c.b16 %v1708, %v1707
    %v1722 = vpack.c.b16 %v1710, %v1709
    %v1723 = vpack.c.b16 %v1712, %v1711
    %v1724 = vpack.c.b16 %v1714, %v1713
    %v1725 = vpack.c.b16 %v1716, %v1715
    %v1726 = vpack.c.b16 %v1718, %v1717
    %1735 = vmatprep.subr.bf16.mxu0 0
    %1736 = vmatpush1.bf16.msra.mxu0 %v1726
    %1737 = vmatprep.subr.bf16.mxu0 0
    %1738 = vmatpush1.bf16.msra.mxu0 %v1725
    %1739 = vmatprep.subr.bf16.mxu0 0
    %1740 = vmatpush1.bf16.msra.mxu0 %v1724
    %1741 = vmatprep.subr.bf16.mxu0 0
    %1742 = vmatpush1.bf16.msra.mxu0 %v1723
    %1743 = vmatprep.subr.bf16.mxu0 0
    %1744 = vmatpush1.bf16.msra.mxu0 %v1722
    %1745 = vmatprep.subr.bf16.mxu0 0
    %1746 = vmatpush1.bf16.msra.mxu0 %v1721
    %1747 = vmatprep.subr.bf16.mxu0 0
    %1748 = vmatpush1.bf16.msra.mxu0 %v1720
    %1749 = vmatprep.subr.bf16.mxu0 0
    %1750 = vmatpush1.bf16.msra.mxu0 %v1719
    %1751 = vmatprep.subr.bf16.mxu0 0
    %1752 = vmatpush2.bf16.msra.mxu0 0
    %1753 = vmatprep.subr.bf16.mxu0 0
    %1754 = vmatpush2.bf16.msra.mxu0 0
    %1755 = vmatprep.subr.bf16.mxu0 0
    %1756 = vmatpush2.bf16.msra.mxu0 0
    %1757 = vmatprep.subr.bf16.mxu0 0
    %1758 = vmatpush2.bf16.msra.mxu0 0
    %1759 = vmatprep.subr.bf16.mxu0 0
    %1760 = vmatpush2.bf16.msra.mxu0 0
    %1761 = vmatprep.subr.bf16.mxu0 0
    %1762 = vmatpush2.bf16.msra.mxu0 0
    %1763 = vmatprep.subr.bf16.mxu0 0
    %1764 = vmatpush2.bf16.msra.mxu0 0
    %1765 = vmatprep.subr.bf16.mxu0 0
    %1766 = vmatpush2.bf16.msra.mxu0 0
    %1767 = vmatprep.mubr.bf16.mxu0 0
    %1768 = vmatmul.mubr.bf16.gmra.mxu0 %v1663
    %v1769 = vpop.f32.mrf.mxu0
    %v1770 = vadd.f32 %v1685, %v1769
    %v1771 = vpop.f32.mrf.mxu0
    %v1772 = vpop.f32.mrf.mxu0
    %v1773 = vpop.f32.mrf.mxu0
    %1774 = vdwg.mxu0
    %1775 = vst [vmem:[#allocation20] sm:$0xff] %v1770
    // Predicated region
    $region118: #{tpu_custom_call.1} parent=1 // pred_check
      _
    $region119: #{tpu_custom_call.1} parent=1 // pred_check_branch
      %1777 = sbr.rel (0) target = $region121
    $region120: #{tpu_custom_call.1} parent=1 // pred_region
      %s1779 = ssub.s32 128, 128
      %1780 = vsyncadd [#allocation4], %s1779
      %s1782 = sshll.u32 [#allocation20], 4
      %s1783 = int_to_ptr.vmem [resolvable:$true] %s1782
      %1785 = dma.vmem_to_hbm [thread:$0]  %s1783, 128, %s18, [#allocation4]
    $region121: #{tpu_custom_call.1} parent=1 // pred_fallthru
      _
    // Predicated region
    $region122: #{tpu_custom_call.1} parent=1 // pred_check
      _
    $region123: #{tpu_custom_call.1} parent=1 // pred_check_branch
      %1787 = sbr.rel (0) target = $region125
    $region124: #{tpu_custom_call.1} parent=1 // pred_region
      %1788 = dma.done [#allocation4], 128
    $region125: #{tpu_custom_call.1} parent=1 // pred_fallthru
      _
    %1789 = vsyncpa [#allocation3], 1
    %1790 = vsyncpa [#allocation6], 1
    %1791 = vsyncpa [#allocation9], 1
    %1792 = vsyncpa [#allocation12], 1
    %1793 = vsyncpa [#allocation15], 1
    %1794 = vsyncpa [#allocation18], 1
    %1795 = vsyncpa [#allocation4], 1

</llo_original>
